<compile_context>
chip_gen: v5e
topology: v5e:2x2
jax: 0.10.0
libtpu: 0.0.40
codegen_flags: <defaults>
</compile_context>

<pallas_src>
import jax
import jax.numpy as jnp
from jax.experimental import pallas as pl
from jax.experimental.pallas import tpu as pltpu

# ----------------------------- config (small BERT) -----------------------------
VOCAB = 64
TYPE_VOCAB = 2
MAX_POS = 16
HIDDEN = 32
NUM_HEADS = 2
HEAD_DIM = HIDDEN // NUM_HEADS
INTERMEDIATE = 64
NUM_LAYERS = 2
LN_EPS = 1e-12
ATTN_SCALE = HEAD_DIM ** -0.5
PARAMS_PER_LAYER = 12


# ----------------------------- in-kernel helpers --------------------------------
def _layer_norm(h, g, b):
    mean = jnp.mean(h, axis=-1, keepdims=True)
    var = jnp.mean((h - mean) ** 2, axis=-1, keepdims=True)
    return (h - mean) * jax.lax.rsqrt(var + LN_EPS) * g + b


def _gelu(y):
    # tanh-approx GELU (see TODO above)
    return 0.5 * y * (1.0 + jnp.tanh(0.7978845608028654 * (y + 0.044715 * y * y * y)))


# ----------------------------- fused encoder kernel ------------------------------
def _encoder_kernel(emb_ref, mask_ref, emb_g_ref, emb_b_ref, *rest):
    """One grid step = full BERT forward for one batch element, all in VMEM."""
    out_ref = rest[-1]
    layer_refs = rest[:-1]
    num_layers = len(layer_refs) // PARAMS_PER_LAYER

    h = _layer_norm(emb_ref[0], emb_g_ref[...], emb_b_ref[...])     # [S, H]
    bias = mask_ref[0]                                              # [1, S] additive mask

    for l in range(num_layers):
        (qkv_w, qkv_b, o_w, o_b, ln1_g, ln1_b,
         i_w, i_b, f_w, f_b, ln2_g, ln2_b) = layer_refs[
            l * PARAMS_PER_LAYER:(l + 1) * PARAMS_PER_LAYER]

        # --- fused Q/K/V projection: one MXU push, [S, 3H] result stays in VMEM
        qkv = jnp.dot(h, qkv_w[...], preferred_element_type=jnp.float32) + qkv_b[...]

        # --- multi-head attention (static lane slices, no head transpose)
        head_ctx = []
        for hh in range(NUM_HEADS):
            c = hh * HEAD_DIM
            qh = qkv[:, c:c + HEAD_DIM]                              # [S, hd]
            kh = qkv[:, HIDDEN + c:HIDDEN + c + HEAD_DIM]            # [S, hd]
            vh = qkv[:, 2 * HIDDEN + c:2 * HIDDEN + c + HEAD_DIM]    # [S, hd]
            # q @ k^T without an explicit transpose (contract on dim 1 of both)
            s = jax.lax.dot_general(qh, kh, (((1,), (1,)), ((), ())),
                                    preferred_element_type=jnp.float32)
            s = s * ATTN_SCALE + bias                                # [S, S]
            m = jnp.max(s, axis=-1, keepdims=True)
            p = jnp.exp(s - m)
            p = p / jnp.sum(p, axis=-1, keepdims=True)
            head_ctx.append(jnp.dot(p, vh, preferred_element_type=jnp.float32))
        ctx = jnp.concatenate(head_ctx, axis=-1)                     # [S, H]

        attn_out = jnp.dot(ctx, o_w[...], preferred_element_type=jnp.float32) + o_b[...]
        h = _layer_norm(attn_out + h, ln1_g[...], ln1_b[...])

        # --- feed-forward
        ff = jnp.dot(h, i_w[...], preferred_element_type=jnp.float32) + i_b[...]
        ff = _gelu(ff)
        ff_out = jnp.dot(ff, f_w[...], preferred_element_type=jnp.float32) + f_b[...]
        h = _layer_norm(ff_out + h, ln2_g[...], ln2_b[...])

    out_ref[0] = h.astype(out_ref.dtype)


def _full_spec(shape):
    # whole array resident in VMEM, same block for every grid step (no re-fetch)
    ndim = len(shape)
    return pl.BlockSpec(shape, lambda b, _n=ndim: (0,) * _n)


# ----------------------------- parameter init ----------------------------------
def init_params(key):
    keys = iter(jax.random.split(key, 64))

    def nrm(shape):
        return (0.02 * jax.random.normal(next(keys), shape)).astype(jnp.float32)

    params = {
        "word_emb": nrm((VOCAB, HIDDEN)),
        "pos_emb": nrm((MAX_POS, HIDDEN)),
        "type_emb": nrm((TYPE_VOCAB, HIDDEN)),
        "emb_ln_g": jnp.ones((HIDDEN,), jnp.float32),
        "emb_ln_b": jnp.zeros((HIDDEN,), jnp.float32),
        "layers": [],
    }
    for _ in range(NUM_LAYERS):
        params["layers"].append({
            "qkv_w": nrm((HIDDEN, 3 * HIDDEN)),
            "qkv_b": jnp.zeros((3 * HIDDEN,), jnp.float32),
            "o_w": nrm((HIDDEN, HIDDEN)), "o_b": jnp.zeros((HIDDEN,), jnp.float32),
            "ln1_g": jnp.ones((HIDDEN,), jnp.float32), "ln1_b": jnp.zeros((HIDDEN,), jnp.float32),
            "i_w": nrm((HIDDEN, INTERMEDIATE)), "i_b": jnp.zeros((INTERMEDIATE,), jnp.float32),
            "f_w": nrm((INTERMEDIATE, HIDDEN)), "f_b": jnp.zeros((HIDDEN,), jnp.float32),
            "ln2_g": jnp.ones((HIDDEN,), jnp.float32), "ln2_b": jnp.zeros((HIDDEN,), jnp.float32),
        })
    return params


# ----------------------------- model forward ------------------------------------
def bert_sentence_encoder(params, input_ids, attention_mask, token_type_ids):
    B, S = input_ids.shape

    # embeddings (gathers are XLA glue; everything after runs in the fused kernel)
    pos_ids = jnp.arange(S)
    emb = (params["word_emb"][input_ids]
           + params["pos_emb"][pos_ids][None, :, :]
           + params["type_emb"][token_type_ids])                    # [B, S, H]

    # additive attention-mask bias, kept as [B, 1, S] (NOT repeated per head)
    mask_bias = ((1.0 - attention_mask.astype(jnp.float32)) * (-1e9))[:, None, :]

    flat_layer_params = []
    for lp in params["layers"]:
        flat_layer_params += [
            lp["qkv_w"], lp["qkv_b"].reshape(1, -1),
            lp["o_w"], lp["o_b"].reshape(1, -1),
            lp["ln1_g"].reshape(1, -1), lp["ln1_b"].reshape(1, -1),
            lp["i_w"], lp["i_b"].reshape(1, -1),
            lp["f_w"], lp["f_b"].reshape(1, -1),
            lp["ln2_g"].reshape(1, -1), lp["ln2_b"].reshape(1, -1),
        ]

    args = [emb, mask_bias,
            params["emb_ln_g"].reshape(1, -1),
            params["emb_ln_b"].reshape(1, -1)] + flat_layer_params

    in_specs = [pl.BlockSpec((1, S, HIDDEN), lambda b: (b, 0, 0)),   # per-batch activations
                pl.BlockSpec((1, 1, S), lambda b: (b, 0, 0))]        # per-batch mask bias
    in_specs += [_full_spec(a.shape) for a in args[2:]]              # params: whole, constant

    last_hidden_state = pl.pallas_call(
        _encoder_kernel,
        out_shape=jax.ShapeDtypeStruct((B, S, HIDDEN), jnp.float32),
        grid=(B,),
        in_specs=in_specs,
        out_specs=pl.BlockSpec((1, S, HIDDEN), lambda b: (b, 0, 0)),
        compiler_params=pltpu.CompilerParams(
            dimension_semantics=("parallel",)),                      # v7x: 1 batch / TensorCore
    )(*args)

    y = last_hidden_state[:, 0]                                      # CLS token
    # key_padding_mask follows the reference module exactly: derived from
    # token_type_ids with position 0 forced to 1, then logical_not.
    key_padding_mask = jnp.logical_not(token_type_ids.at[:, 0].set(1))
    return last_hidden_state, y, key_padding_mask


# ----------------------------- main ---------------------------------------------
if __name__ == "__main__":
    B, S = 2, 8
    key = jax.random.PRNGKey(0)
    k_params, k_ids = jax.random.split(key)

    params = init_params(k_params)

    input_ids = jax.random.randint(k_ids, (B, S), 0, VOCAB, dtype=jnp.int32)
    # batch 0: full sequence, batch 1: last 2 tokens are padding
    attention_mask = jnp.array([[1] * S, [1] * (S - 2) + [0, 0]], dtype=jnp.int32)
    # token_type_ids: second half of each sentence is segment B
    token_type_ids = jnp.array([[0] * (S // 2) + [1] * (S // 2),
                                [0] * (S // 2) + [1] * (S // 2)], dtype=jnp.int32)

    last_hidden_state, y, key_padding_mask = bert_sentence_encoder(
        params, input_ids, attention_mask, token_type_ids)

    jax.block_until_ready((last_hidden_state, y, key_padding_mask))

    assert last_hidden_state.shape == (B, S, HIDDEN)
    assert y.shape == (B, HIDDEN)
    assert key_padding_mask.shape == (B, S) and key_padding_mask.dtype == jnp.bool_
    assert bool(jnp.all(jnp.isfinite(last_hidden_state)))

    print("KERNEL_OK")
</pallas_src>

<mosaic_0001>
module attributes {stable_mosaic.version = 11 : i64} {
  func.func @_encoder_kernel(%arg0: i32, %arg1: memref<1x8x32xf32, #tpu.memory_space<vmem>>, %arg2: memref<1x1x8xf32, #tpu.memory_space<vmem>>, %arg3: memref<1x32xf32, #tpu.memory_space<vmem>>, %arg4: memref<1x32xf32, #tpu.memory_space<vmem>>, %arg5: memref<32x96xf32, #tpu.memory_space<vmem>>, %arg6: memref<1x96xf32, #tpu.memory_space<vmem>>, %arg7: memref<32x32xf32, #tpu.memory_space<vmem>>, %arg8: memref<1x32xf32, #tpu.memory_space<vmem>>, %arg9: memref<1x32xf32, #tpu.memory_space<vmem>>, %arg10: memref<1x32xf32, #tpu.memory_space<vmem>>, %arg11: memref<32x64xf32, #tpu.memory_space<vmem>>, %arg12: memref<1x64xf32, #tpu.memory_space<vmem>>, %arg13: memref<64x32xf32, #tpu.memory_space<vmem>>, %arg14: memref<1x32xf32, #tpu.memory_space<vmem>>, %arg15: memref<1x32xf32, #tpu.memory_space<vmem>>, %arg16: memref<1x32xf32, #tpu.memory_space<vmem>>, %arg17: memref<32x96xf32, #tpu.memory_space<vmem>>, %arg18: memref<1x96xf32, #tpu.memory_space<vmem>>, %arg19: memref<32x32xf32, #tpu.memory_space<vmem>>, %arg20: memref<1x32xf32, #tpu.memory_space<vmem>>, %arg21: memref<1x32xf32, #tpu.memory_space<vmem>>, %arg22: memref<1x32xf32, #tpu.memory_space<vmem>>, %arg23: memref<32x64xf32, #tpu.memory_space<vmem>>, %arg24: memref<1x64xf32, #tpu.memory_space<vmem>>, %arg25: memref<64x32xf32, #tpu.memory_space<vmem>>, %arg26: memref<1x32xf32, #tpu.memory_space<vmem>>, %arg27: memref<1x32xf32, #tpu.memory_space<vmem>>, %arg28: memref<1x32xf32, #tpu.memory_space<vmem>>, %arg29: memref<1x8x32xf32, #tpu.memory_space<vmem>>) attributes {dimension_semantics = [#tpu.dimension_semantics<parallel>], iteration_bounds = array<i64: 2>, scalar_prefetch = 0 : i64, scratch_operands = 0 : i64, tpu.core_type = #tpu.core_type<tc>, window_params = [{transform_indices = @transform_0, window_bounds = array<i64: 1, 8, 32>}, {transform_indices = @transform_1, window_bounds = array<i64: 1, 1, 8>}, {pipeline_mode = #tpu.pipeline_mode<synchronous>, transform_indices = @transform_2, window_bounds = array<i64: 1, 32>}, {pipeline_mode = #tpu.pipeline_mode<synchronous>, transform_indices = @transform_3, window_bounds = array<i64: 1, 32>}, {pipeline_mode = #tpu.pipeline_mode<synchronous>, transform_indices = @transform_4, window_bounds = array<i64: 32, 96>}, {pipeline_mode = #tpu.pipeline_mode<synchronous>, transform_indices = @transform_5, window_bounds = array<i64: 1, 96>}, {pipeline_mode = #tpu.pipeline_mode<synchronous>, transform_indices = @transform_6, window_bounds = array<i64: 32, 32>}, {pipeline_mode = #tpu.pipeline_mode<synchronous>, transform_indices = @transform_7, window_bounds = array<i64: 1, 32>}, {pipeline_mode = #tpu.pipeline_mode<synchronous>, transform_indices = @transform_8, window_bounds = array<i64: 1, 32>}, {pipeline_mode = #tpu.pipeline_mode<synchronous>, transform_indices = @transform_9, window_bounds = array<i64: 1, 32>}, {pipeline_mode = #tpu.pipeline_mode<synchronous>, transform_indices = @transform_10, window_bounds = array<i64: 32, 64>}, {pipeline_mode = #tpu.pipeline_mode<synchronous>, transform_indices = @transform_11, window_bounds = array<i64: 1, 64>}, {pipeline_mode = #tpu.pipeline_mode<synchronous>, transform_indices = @transform_12, window_bounds = array<i64: 64, 32>}, {pipeline_mode = #tpu.pipeline_mode<synchronous>, transform_indices = @transform_13, window_bounds = array<i64: 1, 32>}, {pipeline_mode = #tpu.pipeline_mode<synchronous>, transform_indices = @transform_14, window_bounds = array<i64: 1, 32>}, {pipeline_mode = #tpu.pipeline_mode<synchronous>, transform_indices = @transform_15, window_bounds = array<i64: 1, 32>}, {pipeline_mode = #tpu.pipeline_mode<synchronous>, transform_indices = @transform_16, window_bounds = array<i64: 32, 96>}, {pipeline_mode = #tpu.pipeline_mode<synchronous>, transform_indices = @transform_17, window_bounds = array<i64: 1, 96>}, {pipeline_mode = #tpu.pipeline_mode<synchronous>, transform_indices = @transform_18, window_bounds = array<i64: 32, 32>}, {pipeline_mode = #tpu.pipeline_mode<synchronous>, transform_indices = @transform_19, window_bounds = array<i64: 1, 32>}, {pipeline_mode = #tpu.pipeline_mode<synchronous>, transform_indices = @transform_20, window_bounds = array<i64: 1, 32>}, {pipeline_mode = #tpu.pipeline_mode<synchronous>, transform_indices = @transform_21, window_bounds = array<i64: 1, 32>}, {pipeline_mode = #tpu.pipeline_mode<synchronous>, transform_indices = @transform_22, window_bounds = array<i64: 32, 64>}, {pipeline_mode = #tpu.pipeline_mode<synchronous>, transform_indices = @transform_23, window_bounds = array<i64: 1, 64>}, {pipeline_mode = #tpu.pipeline_mode<synchronous>, transform_indices = @transform_24, window_bounds = array<i64: 64, 32>}, {pipeline_mode = #tpu.pipeline_mode<synchronous>, transform_indices = @transform_25, window_bounds = array<i64: 1, 32>}, {pipeline_mode = #tpu.pipeline_mode<synchronous>, transform_indices = @transform_26, window_bounds = array<i64: 1, 32>}, {pipeline_mode = #tpu.pipeline_mode<synchronous>, transform_indices = @transform_27, window_bounds = array<i64: 1, 32>}, {transform_indices = @transform_28, window_bounds = array<i64: 1, 8, 32>}]} {
    %c0 = arith.constant 0 : index
    %c0_0 = arith.constant 0 : index
    %c0_1 = arith.constant 0 : index
    %0 = vector.load %arg1[%c0, %c0_0, %c0_1] : memref<1x8x32xf32, #tpu.memory_space<vmem>>, vector<1x8x32xf32>
    %1 = vector.shape_cast %0 : vector<1x8x32xf32> to vector<8x32xf32>
    %c0_2 = arith.constant 0 : index
    %c0_3 = arith.constant 0 : index
    %2 = vector.load %arg3[%c0_2, %c0_3] : memref<1x32xf32, #tpu.memory_space<vmem>>, vector<1x32xf32>
    %c0_4 = arith.constant 0 : index
    %c0_5 = arith.constant 0 : index
    %3 = vector.load %arg4[%c0_4, %c0_5] : memref<1x32xf32, #tpu.memory_space<vmem>>, vector<1x32xf32>
    %cst = arith.constant dense<0.000000e+00> : vector<8xf32>
    %4 = vector.multi_reduction <add>, %1, %cst [1] : vector<8x32xf32> to vector<8xf32>
    %5 = vector.shape_cast %4 : vector<8xf32> to vector<8x1xf32>
    %cst_6 = arith.constant 3.200000e+01 : f32
    %6 = vector.broadcast %cst_6 : f32 to vector<8x1xf32>
    %7 = arith.divf %5, %6 : vector<8x1xf32>
    %8 = vector.broadcast %7 : vector<8x1xf32> to vector<8x32xf32>
    %9 = arith.subf %1, %8 : vector<8x32xf32>
    %10 = arith.mulf %9, %9 : vector<8x32xf32>
    %cst_7 = arith.constant dense<0.000000e+00> : vector<8xf32>
    %11 = vector.multi_reduction <add>, %10, %cst_7 [1] : vector<8x32xf32> to vector<8xf32>
    %12 = vector.shape_cast %11 : vector<8xf32> to vector<8x1xf32>
    %cst_8 = arith.constant 3.200000e+01 : f32
    %13 = vector.broadcast %cst_8 : f32 to vector<8x1xf32>
    %14 = arith.divf %12, %13 : vector<8x1xf32>
    %15 = vector.broadcast %7 : vector<8x1xf32> to vector<8x32xf32>
    %16 = arith.subf %1, %15 : vector<8x32xf32>
    %cst_9 = arith.constant 9.99999996E-13 : f32
    %17 = vector.broadcast %cst_9 : f32 to vector<8x1xf32>
    %18 = arith.addf %14, %17 : vector<8x1xf32>
    %19 = math.rsqrt %18 : vector<8x1xf32>
    %20 = vector.broadcast %19 : vector<8x1xf32> to vector<8x32xf32>
    %21 = arith.mulf %16, %20 : vector<8x32xf32>
    %22 = vector.broadcast %2 : vector<1x32xf32> to vector<8x32xf32>
    %23 = arith.mulf %21, %22 : vector<8x32xf32>
    %24 = vector.broadcast %3 : vector<1x32xf32> to vector<8x32xf32>
    %25 = arith.addf %23, %24 : vector<8x32xf32>
    %c0_10 = arith.constant 0 : index
    %c0_11 = arith.constant 0 : index
    %c0_12 = arith.constant 0 : index
    %26 = vector.load %arg2[%c0_10, %c0_11, %c0_12] : memref<1x1x8xf32, #tpu.memory_space<vmem>>, vector<1x1x8xf32>
    %27 = vector.shape_cast %26 : vector<1x1x8xf32> to vector<1x8xf32>
    %c0_13 = arith.constant 0 : index
    %c0_14 = arith.constant 0 : index
    %28 = vector.load %arg5[%c0_13, %c0_14] : memref<32x96xf32, #tpu.memory_space<vmem>>, vector<32x96xf32>
    %cst_15 = arith.constant dense<0.000000e+00> : vector<8x96xf32>
    %29 = tpu.matmul %25, %28, %cst_15 {dimension_numbers = #tpu.dot_dimension_numbers<[1], [0], [0], [1], [0, 0, 1, 1], [], []>} : vector<8x32xf32>, vector<32x96xf32>, vector<8x96xf32> -> vector<8x96xf32>
    %c0_16 = arith.constant 0 : index
    %c0_17 = arith.constant 0 : index
    %30 = vector.load %arg6[%c0_16, %c0_17] : memref<1x96xf32, #tpu.memory_space<vmem>>, vector<1x96xf32>
    %31 = vector.broadcast %30 : vector<1x96xf32> to vector<8x96xf32>
    %32 = arith.addf %29, %31 : vector<8x96xf32>
    %33 = vector.extract_strided_slice %32 {offsets = [0, 0], sizes = [8, 16], strides = [1, 1]} : vector<8x96xf32> to vector<8x16xf32>
    %34 = vector.extract_strided_slice %32 {offsets = [0, 32], sizes = [8, 16], strides = [1, 1]} : vector<8x96xf32> to vector<8x16xf32>
    %35 = vector.extract_strided_slice %32 {offsets = [0, 64], sizes = [8, 16], strides = [1, 1]} : vector<8x96xf32> to vector<8x16xf32>
    %cst_18 = arith.constant dense<0.000000e+00> : vector<8x8xf32>
    %36 = tpu.matmul %33, %34, %cst_18 {dimension_numbers = #tpu.dot_dimension_numbers<[1], [1], [0], [0], [0, 0, 1, 0], [], []>} : vector<8x16xf32>, vector<8x16xf32>, vector<8x8xf32> -> vector<8x8xf32>
    %cst_19 = arith.constant 2.500000e-01 : f32
    %37 = vector.broadcast %cst_19 : f32 to vector<8x8xf32>
    %38 = arith.mulf %36, %37 : vector<8x8xf32>
    %39 = vector.broadcast %27 : vector<1x8xf32> to vector<8x8xf32>
    %40 = arith.addf %38, %39 : vector<8x8xf32>
    %cst_20 = arith.constant dense<0xFF800000> : vector<8xf32>
    %41 = vector.multi_reduction <maximumf>, %40, %cst_20 [1] : vector<8x8xf32> to vector<8xf32>
    %42 = vector.shape_cast %41 : vector<8xf32> to vector<8x1xf32>
    %43 = vector.broadcast %42 : vector<8x1xf32> to vector<8x8xf32>
    %44 = arith.subf %40, %43 : vector<8x8xf32>
    %45 = math.exp %44 : vector<8x8xf32>
    %cst_21 = arith.constant dense<0.000000e+00> : vector<8xf32>
    %46 = vector.multi_reduction <add>, %45, %cst_21 [1] : vector<8x8xf32> to vector<8xf32>
    %47 = vector.shape_cast %46 : vector<8xf32> to vector<8x1xf32>
    %48 = vector.broadcast %47 : vector<8x1xf32> to vector<8x8xf32>
    %49 = arith.divf %45, %48 : vector<8x8xf32>
    %cst_22 = arith.constant dense<0.000000e+00> : vector<8x16xf32>
    %50 = tpu.matmul %49, %35, %cst_22 {dimension_numbers = #tpu.dot_dimension_numbers<[1], [0], [0], [1], [0, 0, 1, 1], [], []>} : vector<8x8xf32>, vector<8x16xf32>, vector<8x16xf32> -> vector<8x16xf32>
    %51 = vector.extract_strided_slice %32 {offsets = [0, 16], sizes = [8, 16], strides = [1, 1]} : vector<8x96xf32> to vector<8x16xf32>
    %52 = vector.extract_strided_slice %32 {offsets = [0, 48], sizes = [8, 16], strides = [1, 1]} : vector<8x96xf32> to vector<8x16xf32>
    %53 = vector.extract_strided_slice %32 {offsets = [0, 80], sizes = [8, 16], strides = [1, 1]} : vector<8x96xf32> to vector<8x16xf32>
    %cst_23 = arith.constant dense<0.000000e+00> : vector<8x8xf32>
    %54 = tpu.matmul %51, %52, %cst_23 {dimension_numbers = #tpu.dot_dimension_numbers<[1], [1], [0], [0], [0, 0, 1, 0], [], []>} : vector<8x16xf32>, vector<8x16xf32>, vector<8x8xf32> -> vector<8x8xf32>
    %cst_24 = arith.constant 2.500000e-01 : f32
    %55 = vector.broadcast %cst_24 : f32 to vector<8x8xf32>
    %56 = arith.mulf %54, %55 : vector<8x8xf32>
    %57 = vector.broadcast %27 : vector<1x8xf32> to vector<8x8xf32>
    %58 = arith.addf %56, %57 : vector<8x8xf32>
    %cst_25 = arith.constant dense<0xFF800000> : vector<8xf32>
    %59 = vector.multi_reduction <maximumf>, %58, %cst_25 [1] : vector<8x8xf32> to vector<8xf32>
    %60 = vector.shape_cast %59 : vector<8xf32> to vector<8x1xf32>
    %61 = vector.broadcast %60 : vector<8x1xf32> to vector<8x8xf32>
    %62 = arith.subf %58, %61 : vector<8x8xf32>
    %63 = math.exp %62 : vector<8x8xf32>
    %cst_26 = arith.constant dense<0.000000e+00> : vector<8xf32>
    %64 = vector.multi_reduction <add>, %63, %cst_26 [1] : vector<8x8xf32> to vector<8xf32>
    %65 = vector.shape_cast %64 : vector<8xf32> to vector<8x1xf32>
    %66 = vector.broadcast %65 : vector<8x1xf32> to vector<8x8xf32>
    %67 = arith.divf %63, %66 : vector<8x8xf32>
    %cst_27 = arith.constant dense<0.000000e+00> : vector<8x16xf32>
    %68 = tpu.matmul %67, %53, %cst_27 {dimension_numbers = #tpu.dot_dimension_numbers<[1], [0], [0], [1], [0, 0, 1, 1], [], []>} : vector<8x8xf32>, vector<8x16xf32>, vector<8x16xf32> -> vector<8x16xf32>
    %69 = tpu.concatenate %50, %68 in 1 : vector<8x16xf32>, vector<8x16xf32> -> vector<8x32xf32>
    %c0_28 = arith.constant 0 : index
    %c0_29 = arith.constant 0 : index
    %70 = vector.load %arg7[%c0_28, %c0_29] : memref<32x32xf32, #tpu.memory_space<vmem>>, vector<32x32xf32>
    %cst_30 = arith.constant dense<0.000000e+00> : vector<8x32xf32>
    %71 = tpu.matmul %69, %70, %cst_30 {dimension_numbers = #tpu.dot_dimension_numbers<[1], [0], [0], [1], [0, 0, 1, 1], [], []>} : vector<8x32xf32>, vector<32x32xf32>, vector<8x32xf32> -> vector<8x32xf32>
    %c0_31 = arith.constant 0 : index
    %c0_32 = arith.constant 0 : index
    %72 = vector.load %arg8[%c0_31, %c0_32] : memref<1x32xf32, #tpu.memory_space<vmem>>, vector<1x32xf32>
    %73 = vector.broadcast %72 : vector<1x32xf32> to vector<8x32xf32>
    %74 = arith.addf %71, %73 : vector<8x32xf32>
    %75 = arith.addf %74, %25 : vector<8x32xf32>
    %c0_33 = arith.constant 0 : index
    %c0_34 = arith.constant 0 : index
    %76 = vector.load %arg9[%c0_33, %c0_34] : memref<1x32xf32, #tpu.memory_space<vmem>>, vector<1x32xf32>
    %c0_35 = arith.constant 0 : index
    %c0_36 = arith.constant 0 : index
    %77 = vector.load %arg10[%c0_35, %c0_36] : memref<1x32xf32, #tpu.memory_space<vmem>>, vector<1x32xf32>
    %cst_37 = arith.constant dense<0.000000e+00> : vector<8xf32>
    %78 = vector.multi_reduction <add>, %75, %cst_37 [1] : vector<8x32xf32> to vector<8xf32>
    %79 = vector.shape_cast %78 : vector<8xf32> to vector<8x1xf32>
    %cst_38 = arith.constant 3.200000e+01 : f32
    %80 = vector.broadcast %cst_38 : f32 to vector<8x1xf32>
    %81 = arith.divf %79, %80 : vector<8x1xf32>
    %82 = vector.broadcast %81 : vector<8x1xf32> to vector<8x32xf32>
    %83 = arith.subf %75, %82 : vector<8x32xf32>
    %84 = arith.mulf %83, %83 : vector<8x32xf32>
    %cst_39 = arith.constant dense<0.000000e+00> : vector<8xf32>
    %85 = vector.multi_reduction <add>, %84, %cst_39 [1] : vector<8x32xf32> to vector<8xf32>
    %86 = vector.shape_cast %85 : vector<8xf32> to vector<8x1xf32>
    %cst_40 = arith.constant 3.200000e+01 : f32
    %87 = vector.broadcast %cst_40 : f32 to vector<8x1xf32>
    %88 = arith.divf %86, %87 : vector<8x1xf32>
    %89 = vector.broadcast %81 : vector<8x1xf32> to vector<8x32xf32>
    %90 = arith.subf %75, %89 : vector<8x32xf32>
    %cst_41 = arith.constant 9.99999996E-13 : f32
    %91 = vector.broadcast %cst_41 : f32 to vector<8x1xf32>
    %92 = arith.addf %88, %91 : vector<8x1xf32>
    %93 = math.rsqrt %92 : vector<8x1xf32>
    %94 = vector.broadcast %93 : vector<8x1xf32> to vector<8x32xf32>
    %95 = arith.mulf %90, %94 : vector<8x32xf32>
    %96 = vector.broadcast %76 : vector<1x32xf32> to vector<8x32xf32>
    %97 = arith.mulf %95, %96 : vector<8x32xf32>
    %98 = vector.broadcast %77 : vector<1x32xf32> to vector<8x32xf32>
    %99 = arith.addf %97, %98 : vector<8x32xf32>
    %c0_42 = arith.constant 0 : index
    %c0_43 = arith.constant 0 : index
    %100 = vector.load %arg11[%c0_42, %c0_43] : memref<32x64xf32, #tpu.memory_space<vmem>>, vector<32x64xf32>
    %cst_44 = arith.constant dense<0.000000e+00> : vector<8x64xf32>
    %101 = tpu.matmul %99, %100, %cst_44 {dimension_numbers = #tpu.dot_dimension_numbers<[1], [0], [0], [1], [0, 0, 1, 1], [], []>} : vector<8x32xf32>, vector<32x64xf32>, vector<8x64xf32> -> vector<8x64xf32>
    %c0_45 = arith.constant 0 : index
    %c0_46 = arith.constant 0 : index
    %102 = vector.load %arg12[%c0_45, %c0_46] : memref<1x64xf32, #tpu.memory_space<vmem>>, vector<1x64xf32>
    %103 = vector.broadcast %102 : vector<1x64xf32> to vector<8x64xf32>
    %104 = arith.addf %101, %103 : vector<8x64xf32>
    %cst_47 = arith.constant 5.000000e-01 : f32
    %105 = vector.broadcast %cst_47 : f32 to vector<8x64xf32>
    %106 = arith.mulf %105, %104 : vector<8x64xf32>
    %cst_48 = arith.constant 4.471500e-02 : f32
    %107 = vector.broadcast %cst_48 : f32 to vector<8x64xf32>
    %108 = arith.mulf %107, %104 : vector<8x64xf32>
    %109 = arith.mulf %108, %104 : vector<8x64xf32>
    %110 = arith.mulf %109, %104 : vector<8x64xf32>
    %111 = arith.addf %104, %110 : vector<8x64xf32>
    %cst_49 = arith.constant 0.797884583 : f32
    %112 = vector.broadcast %cst_49 : f32 to vector<8x64xf32>
    %113 = arith.mulf %112, %111 : vector<8x64xf32>
    %114 = math.tanh %113 : vector<8x64xf32>
    %cst_50 = arith.constant 1.000000e+00 : f32
    %115 = vector.broadcast %cst_50 : f32 to vector<8x64xf32>
    %116 = arith.addf %115, %114 : vector<8x64xf32>
    %117 = arith.mulf %106, %116 : vector<8x64xf32>
    %c0_51 = arith.constant 0 : index
    %c0_52 = arith.constant 0 : index
    %118 = vector.load %arg13[%c0_51, %c0_52] : memref<64x32xf32, #tpu.memory_space<vmem>>, vector<64x32xf32>
    %cst_53 = arith.constant dense<0.000000e+00> : vector<8x32xf32>
    %119 = tpu.matmul %117, %118, %cst_53 {dimension_numbers = #tpu.dot_dimension_numbers<[1], [0], [0], [1], [0, 0, 1, 1], [], []>} : vector<8x64xf32>, vector<64x32xf32>, vector<8x32xf32> -> vector<8x32xf32>
    %c0_54 = arith.constant 0 : index
    %c0_55 = arith.constant 0 : index
    %120 = vector.load %arg14[%c0_54, %c0_55] : memref<1x32xf32, #tpu.memory_space<vmem>>, vector<1x32xf32>
    %121 = vector.broadcast %120 : vector<1x32xf32> to vector<8x32xf32>
    %122 = arith.addf %119, %121 : vector<8x32xf32>
    %123 = arith.addf %122, %99 : vector<8x32xf32>
    %c0_56 = arith.constant 0 : index
    %c0_57 = arith.constant 0 : index
    %124 = vector.load %arg15[%c0_56, %c0_57] : memref<1x32xf32, #tpu.memory_space<vmem>>, vector<1x32xf32>
    %c0_58 = arith.constant 0 : index
    %c0_59 = arith.constant 0 : index
    %125 = vector.load %arg16[%c0_58, %c0_59] : memref<1x32xf32, #tpu.memory_space<vmem>>, vector<1x32xf32>
    %cst_60 = arith.constant dense<0.000000e+00> : vector<8xf32>
    %126 = vector.multi_reduction <add>, %123, %cst_60 [1] : vector<8x32xf32> to vector<8xf32>
    %127 = vector.shape_cast %126 : vector<8xf32> to vector<8x1xf32>
    %cst_61 = arith.constant 3.200000e+01 : f32
    %128 = vector.broadcast %cst_61 : f32 to vector<8x1xf32>
    %129 = arith.divf %127, %128 : vector<8x1xf32>
    %130 = vector.broadcast %129 : vector<8x1xf32> to vector<8x32xf32>
    %131 = arith.subf %123, %130 : vector<8x32xf32>
    %132 = arith.mulf %131, %131 : vector<8x32xf32>
    %cst_62 = arith.constant dense<0.000000e+00> : vector<8xf32>
    %133 = vector.multi_reduction <add>, %132, %cst_62 [1] : vector<8x32xf32> to vector<8xf32>
    %134 = vector.shape_cast %133 : vector<8xf32> to vector<8x1xf32>
    %cst_63 = arith.constant 3.200000e+01 : f32
    %135 = vector.broadcast %cst_63 : f32 to vector<8x1xf32>
    %136 = arith.divf %134, %135 : vector<8x1xf32>
    %137 = vector.broadcast %129 : vector<8x1xf32> to vector<8x32xf32>
    %138 = arith.subf %123, %137 : vector<8x32xf32>
    %cst_64 = arith.constant 9.99999996E-13 : f32
    %139 = vector.broadcast %cst_64 : f32 to vector<8x1xf32>
    %140 = arith.addf %136, %139 : vector<8x1xf32>
    %141 = math.rsqrt %140 : vector<8x1xf32>
    %142 = vector.broadcast %141 : vector<8x1xf32> to vector<8x32xf32>
    %143 = arith.mulf %138, %142 : vector<8x32xf32>
    %144 = vector.broadcast %124 : vector<1x32xf32> to vector<8x32xf32>
    %145 = arith.mulf %143, %144 : vector<8x32xf32>
    %146 = vector.broadcast %125 : vector<1x32xf32> to vector<8x32xf32>
    %147 = arith.addf %145, %146 : vector<8x32xf32>
    %c0_65 = arith.constant 0 : index
    %c0_66 = arith.constant 0 : index
    %148 = vector.load %arg17[%c0_65, %c0_66] : memref<32x96xf32, #tpu.memory_space<vmem>>, vector<32x96xf32>
    %cst_67 = arith.constant dense<0.000000e+00> : vector<8x96xf32>
    %149 = tpu.matmul %147, %148, %cst_67 {dimension_numbers = #tpu.dot_dimension_numbers<[1], [0], [0], [1], [0, 0, 1, 1], [], []>} : vector<8x32xf32>, vector<32x96xf32>, vector<8x96xf32> -> vector<8x96xf32>
    %c0_68 = arith.constant 0 : index
    %c0_69 = arith.constant 0 : index
    %150 = vector.load %arg18[%c0_68, %c0_69] : memref<1x96xf32, #tpu.memory_space<vmem>>, vector<1x96xf32>
    %151 = vector.broadcast %150 : vector<1x96xf32> to vector<8x96xf32>
    %152 = arith.addf %149, %151 : vector<8x96xf32>
    %153 = vector.extract_strided_slice %152 {offsets = [0, 0], sizes = [8, 16], strides = [1, 1]} : vector<8x96xf32> to vector<8x16xf32>
    %154 = vector.extract_strided_slice %152 {offsets = [0, 32], sizes = [8, 16], strides = [1, 1]} : vector<8x96xf32> to vector<8x16xf32>
    %155 = vector.extract_strided_slice %152 {offsets = [0, 64], sizes = [8, 16], strides = [1, 1]} : vector<8x96xf32> to vector<8x16xf32>
    %cst_70 = arith.constant dense<0.000000e+00> : vector<8x8xf32>
    %156 = tpu.matmul %153, %154, %cst_70 {dimension_numbers = #tpu.dot_dimension_numbers<[1], [1], [0], [0], [0, 0, 1, 0], [], []>} : vector<8x16xf32>, vector<8x16xf32>, vector<8x8xf32> -> vector<8x8xf32>
    %cst_71 = arith.constant 2.500000e-01 : f32
    %157 = vector.broadcast %cst_71 : f32 to vector<8x8xf32>
    %158 = arith.mulf %156, %157 : vector<8x8xf32>
    %159 = vector.broadcast %27 : vector<1x8xf32> to vector<8x8xf32>
    %160 = arith.addf %158, %159 : vector<8x8xf32>
    %cst_72 = arith.constant dense<0xFF800000> : vector<8xf32>
    %161 = vector.multi_reduction <maximumf>, %160, %cst_72 [1] : vector<8x8xf32> to vector<8xf32>
    %162 = vector.shape_cast %161 : vector<8xf32> to vector<8x1xf32>
    %163 = vector.broadcast %162 : vector<8x1xf32> to vector<8x8xf32>
    %164 = arith.subf %160, %163 : vector<8x8xf32>
    %165 = math.exp %164 : vector<8x8xf32>
    %cst_73 = arith.constant dense<0.000000e+00> : vector<8xf32>
    %166 = vector.multi_reduction <add>, %165, %cst_73 [1] : vector<8x8xf32> to vector<8xf32>
    %167 = vector.shape_cast %166 : vector<8xf32> to vector<8x1xf32>
    %168 = vector.broadcast %167 : vector<8x1xf32> to vector<8x8xf32>
    %169 = arith.divf %165, %168 : vector<8x8xf32>
    %cst_74 = arith.constant dense<0.000000e+00> : vector<8x16xf32>
    %170 = tpu.matmul %169, %155, %cst_74 {dimension_numbers = #tpu.dot_dimension_numbers<[1], [0], [0], [1], [0, 0, 1, 1], [], []>} : vector<8x8xf32>, vector<8x16xf32>, vector<8x16xf32> -> vector<8x16xf32>
    %171 = vector.extract_strided_slice %152 {offsets = [0, 16], sizes = [8, 16], strides = [1, 1]} : vector<8x96xf32> to vector<8x16xf32>
    %172 = vector.extract_strided_slice %152 {offsets = [0, 48], sizes = [8, 16], strides = [1, 1]} : vector<8x96xf32> to vector<8x16xf32>
    %173 = vector.extract_strided_slice %152 {offsets = [0, 80], sizes = [8, 16], strides = [1, 1]} : vector<8x96xf32> to vector<8x16xf32>
    %cst_75 = arith.constant dense<0.000000e+00> : vector<8x8xf32>
    %174 = tpu.matmul %171, %172, %cst_75 {dimension_numbers = #tpu.dot_dimension_numbers<[1], [1], [0], [0], [0, 0, 1, 0], [], []>} : vector<8x16xf32>, vector<8x16xf32>, vector<8x8xf32> -> vector<8x8xf32>
    %cst_76 = arith.constant 2.500000e-01 : f32
    %175 = vector.broadcast %cst_76 : f32 to vector<8x8xf32>
    %176 = arith.mulf %174, %175 : vector<8x8xf32>
    %177 = vector.broadcast %27 : vector<1x8xf32> to vector<8x8xf32>
    %178 = arith.addf %176, %177 : vector<8x8xf32>
    %cst_77 = arith.constant dense<0xFF800000> : vector<8xf32>
    %179 = vector.multi_reduction <maximumf>, %178, %cst_77 [1] : vector<8x8xf32> to vector<8xf32>
    %180 = vector.shape_cast %179 : vector<8xf32> to vector<8x1xf32>
    %181 = vector.broadcast %180 : vector<8x1xf32> to vector<8x8xf32>
    %182 = arith.subf %178, %181 : vector<8x8xf32>
    %183 = math.exp %182 : vector<8x8xf32>
    %cst_78 = arith.constant dense<0.000000e+00> : vector<8xf32>
    %184 = vector.multi_reduction <add>, %183, %cst_78 [1] : vector<8x8xf32> to vector<8xf32>
    %185 = vector.shape_cast %184 : vector<8xf32> to vector<8x1xf32>
    %186 = vector.broadcast %185 : vector<8x1xf32> to vector<8x8xf32>
    %187 = arith.divf %183, %186 : vector<8x8xf32>
    %cst_79 = arith.constant dense<0.000000e+00> : vector<8x16xf32>
    %188 = tpu.matmul %187, %173, %cst_79 {dimension_numbers = #tpu.dot_dimension_numbers<[1], [0], [0], [1], [0, 0, 1, 1], [], []>} : vector<8x8xf32>, vector<8x16xf32>, vector<8x16xf32> -> vector<8x16xf32>
    %189 = tpu.concatenate %170, %188 in 1 : vector<8x16xf32>, vector<8x16xf32> -> vector<8x32xf32>
    %c0_80 = arith.constant 0 : index
    %c0_81 = arith.constant 0 : index
    %190 = vector.load %arg19[%c0_80, %c0_81] : memref<32x32xf32, #tpu.memory_space<vmem>>, vector<32x32xf32>
    %cst_82 = arith.constant dense<0.000000e+00> : vector<8x32xf32>
    %191 = tpu.matmul %189, %190, %cst_82 {dimension_numbers = #tpu.dot_dimension_numbers<[1], [0], [0], [1], [0, 0, 1, 1], [], []>} : vector<8x32xf32>, vector<32x32xf32>, vector<8x32xf32> -> vector<8x32xf32>
    %c0_83 = arith.constant 0 : index
    %c0_84 = arith.constant 0 : index
    %192 = vector.load %arg20[%c0_83, %c0_84] : memref<1x32xf32, #tpu.memory_space<vmem>>, vector<1x32xf32>
    %193 = vector.broadcast %192 : vector<1x32xf32> to vector<8x32xf32>
    %194 = arith.addf %191, %193 : vector<8x32xf32>
    %195 = arith.addf %194, %147 : vector<8x32xf32>
    %c0_85 = arith.constant 0 : index
    %c0_86 = arith.constant 0 : index
    %196 = vector.load %arg21[%c0_85, %c0_86] : memref<1x32xf32, #tpu.memory_space<vmem>>, vector<1x32xf32>
    %c0_87 = arith.constant 0 : index
    %c0_88 = arith.constant 0 : index
    %197 = vector.load %arg22[%c0_87, %c0_88] : memref<1x32xf32, #tpu.memory_space<vmem>>, vector<1x32xf32>
    %cst_89 = arith.constant dense<0.000000e+00> : vector<8xf32>
    %198 = vector.multi_reduction <add>, %195, %cst_89 [1] : vector<8x32xf32> to vector<8xf32>
    %199 = vector.shape_cast %198 : vector<8xf32> to vector<8x1xf32>
    %cst_90 = arith.constant 3.200000e+01 : f32
    %200 = vector.broadcast %cst_90 : f32 to vector<8x1xf32>
    %201 = arith.divf %199, %200 : vector<8x1xf32>
    %202 = vector.broadcast %201 : vector<8x1xf32> to vector<8x32xf32>
    %203 = arith.subf %195, %202 : vector<8x32xf32>
    %204 = arith.mulf %203, %203 : vector<8x32xf32>
    %cst_91 = arith.constant dense<0.000000e+00> : vector<8xf32>
    %205 = vector.multi_reduction <add>, %204, %cst_91 [1] : vector<8x32xf32> to vector<8xf32>
    %206 = vector.shape_cast %205 : vector<8xf32> to vector<8x1xf32>
    %cst_92 = arith.constant 3.200000e+01 : f32
    %207 = vector.broadcast %cst_92 : f32 to vector<8x1xf32>
    %208 = arith.divf %206, %207 : vector<8x1xf32>
    %209 = vector.broadcast %201 : vector<8x1xf32> to vector<8x32xf32>
    %210 = arith.subf %195, %209 : vector<8x32xf32>
    %cst_93 = arith.constant 9.99999996E-13 : f32
    %211 = vector.broadcast %cst_93 : f32 to vector<8x1xf32>
    %212 = arith.addf %208, %211 : vector<8x1xf32>
    %213 = math.rsqrt %212 : vector<8x1xf32>
    %214 = vector.broadcast %213 : vector<8x1xf32> to vector<8x32xf32>
    %215 = arith.mulf %210, %214 : vector<8x32xf32>
    %216 = vector.broadcast %196 : vector<1x32xf32> to vector<8x32xf32>
    %217 = arith.mulf %215, %216 : vector<8x32xf32>
    %218 = vector.broadcast %197 : vector<1x32xf32> to vector<8x32xf32>
    %219 = arith.addf %217, %218 : vector<8x32xf32>
    %c0_94 = arith.constant 0 : index
    %c0_95 = arith.constant 0 : index
    %220 = vector.load %arg23[%c0_94, %c0_95] : memref<32x64xf32, #tpu.memory_space<vmem>>, vector<32x64xf32>
    %cst_96 = arith.constant dense<0.000000e+00> : vector<8x64xf32>
    %221 = tpu.matmul %219, %220, %cst_96 {dimension_numbers = #tpu.dot_dimension_numbers<[1], [0], [0], [1], [0, 0, 1, 1], [], []>} : vector<8x32xf32>, vector<32x64xf32>, vector<8x64xf32> -> vector<8x64xf32>
    %c0_97 = arith.constant 0 : index
    %c0_98 = arith.constant 0 : index
    %222 = vector.load %arg24[%c0_97, %c0_98] : memref<1x64xf32, #tpu.memory_space<vmem>>, vector<1x64xf32>
    %223 = vector.broadcast %222 : vector<1x64xf32> to vector<8x64xf32>
    %224 = arith.addf %221, %223 : vector<8x64xf32>
    %cst_99 = arith.constant 5.000000e-01 : f32
    %225 = vector.broadcast %cst_99 : f32 to vector<8x64xf32>
    %226 = arith.mulf %225, %224 : vector<8x64xf32>
    %cst_100 = arith.constant 4.471500e-02 : f32
    %227 = vector.broadcast %cst_100 : f32 to vector<8x64xf32>
    %228 = arith.mulf %227, %224 : vector<8x64xf32>
    %229 = arith.mulf %228, %224 : vector<8x64xf32>
    %230 = arith.mulf %229, %224 : vector<8x64xf32>
    %231 = arith.addf %224, %230 : vector<8x64xf32>
    %cst_101 = arith.constant 0.797884583 : f32
    %232 = vector.broadcast %cst_101 : f32 to vector<8x64xf32>
    %233 = arith.mulf %232, %231 : vector<8x64xf32>
    %234 = math.tanh %233 : vector<8x64xf32>
    %cst_102 = arith.constant 1.000000e+00 : f32
    %235 = vector.broadcast %cst_102 : f32 to vector<8x64xf32>
    %236 = arith.addf %235, %234 : vector<8x64xf32>
    %237 = arith.mulf %226, %236 : vector<8x64xf32>
    %c0_103 = arith.constant 0 : index
    %c0_104 = arith.constant 0 : index
    %238 = vector.load %arg25[%c0_103, %c0_104] : memref<64x32xf32, #tpu.memory_space<vmem>>, vector<64x32xf32>
    %cst_105 = arith.constant dense<0.000000e+00> : vector<8x32xf32>
    %239 = tpu.matmul %237, %238, %cst_105 {dimension_numbers = #tpu.dot_dimension_numbers<[1], [0], [0], [1], [0, 0, 1, 1], [], []>} : vector<8x64xf32>, vector<64x32xf32>, vector<8x32xf32> -> vector<8x32xf32>
    %c0_106 = arith.constant 0 : index
    %c0_107 = arith.constant 0 : index
    %240 = vector.load %arg26[%c0_106, %c0_107] : memref<1x32xf32, #tpu.memory_space<vmem>>, vector<1x32xf32>
    %241 = vector.broadcast %240 : vector<1x32xf32> to vector<8x32xf32>
    %242 = arith.addf %239, %241 : vector<8x32xf32>
    %243 = arith.addf %242, %219 : vector<8x32xf32>
    %c0_108 = arith.constant 0 : index
    %c0_109 = arith.constant 0 : index
    %244 = vector.load %arg27[%c0_108, %c0_109] : memref<1x32xf32, #tpu.memory_space<vmem>>, vector<1x32xf32>
    %c0_110 = arith.constant 0 : index
    %c0_111 = arith.constant 0 : index
    %245 = vector.load %arg28[%c0_110, %c0_111] : memref<1x32xf32, #tpu.memory_space<vmem>>, vector<1x32xf32>
    %cst_112 = arith.constant dense<0.000000e+00> : vector<8xf32>
    %246 = vector.multi_reduction <add>, %243, %cst_112 [1] : vector<8x32xf32> to vector<8xf32>
    %247 = vector.shape_cast %246 : vector<8xf32> to vector<8x1xf32>
    %cst_113 = arith.constant 3.200000e+01 : f32
    %248 = vector.broadcast %cst_113 : f32 to vector<8x1xf32>
    %249 = arith.divf %247, %248 : vector<8x1xf32>
    %250 = vector.broadcast %249 : vector<8x1xf32> to vector<8x32xf32>
    %251 = arith.subf %243, %250 : vector<8x32xf32>
    %252 = arith.mulf %251, %251 : vector<8x32xf32>
    %cst_114 = arith.constant dense<0.000000e+00> : vector<8xf32>
    %253 = vector.multi_reduction <add>, %252, %cst_114 [1] : vector<8x32xf32> to vector<8xf32>
    %254 = vector.shape_cast %253 : vector<8xf32> to vector<8x1xf32>
    %cst_115 = arith.constant 3.200000e+01 : f32
    %255 = vector.broadcast %cst_115 : f32 to vector<8x1xf32>
    %256 = arith.divf %254, %255 : vector<8x1xf32>
    %257 = vector.broadcast %249 : vector<8x1xf32> to vector<8x32xf32>
    %258 = arith.subf %243, %257 : vector<8x32xf32>
    %cst_116 = arith.constant 9.99999996E-13 : f32
    %259 = vector.broadcast %cst_116 : f32 to vector<8x1xf32>
    %260 = arith.addf %256, %259 : vector<8x1xf32>
    %261 = math.rsqrt %260 : vector<8x1xf32>
    %262 = vector.broadcast %261 : vector<8x1xf32> to vector<8x32xf32>
    %263 = arith.mulf %258, %262 : vector<8x32xf32>
    %264 = vector.broadcast %244 : vector<1x32xf32> to vector<8x32xf32>
    %265 = arith.mulf %263, %264 : vector<8x32xf32>
    %266 = vector.broadcast %245 : vector<1x32xf32> to vector<8x32xf32>
    %267 = arith.addf %265, %266 : vector<8x32xf32>
    %c0_117 = arith.constant 0 : index
    %c0_118 = arith.constant 0 : index
    %c0_119 = arith.constant 0 : index
    %268 = vector.load %arg29[%c0_117, %c0_118, %c0_119] : memref<1x8x32xf32, #tpu.memory_space<vmem>>, vector<1x8x32xf32>
    %269 = vector.shape_cast %268 : vector<1x8x32xf32> to vector<8x32xf32>
    %270 = vector.shape_cast %267 : vector<8x32xf32> to vector<1x8x32xf32>
    tpu.vector_store %arg29[%c0_117, %c0_118, %c0_119], %270 {strides = array<i32>} : memref<1x8x32xf32, #tpu.memory_space<vmem>>, vector<1x8x32xf32>,
    return
  }
  func.func @transform_0(%arg0: i32) -> (i32, i32, i32) {
    %c0_i32 = arith.constant 0 : i32
    %c0_i32_0 = arith.constant 0 : i32
    %c0_i32_1 = arith.constant 0 : i32
    return %arg0, %c0_i32, %c0_i32_0 : i32, i32, i32
  }
  func.func @transform_1(%arg0: i32) -> (i32, i32, i32) {
    %c0_i32 = arith.constant 0 : i32
    %c0_i32_0 = arith.constant 0 : i32
    %c0_i32_1 = arith.constant 0 : i32
    return %arg0, %c0_i32, %c0_i32_0 : i32, i32, i32
  }
  func.func @transform_2(%arg0: i32) -> (i32, i32) {
    %c0_i32 = arith.constant 0 : i32
    %c0_i32_0 = arith.constant 0 : i32
    %c0_i32_1 = arith.constant 0 : i32
    return %c0_i32, %c0_i32_0 : i32, i32
  }
  func.func @transform_3(%arg0: i32) -> (i32, i32) {
    %c0_i32 = arith.constant 0 : i32
    %c0_i32_0 = arith.constant 0 : i32
    %c0_i32_1 = arith.constant 0 : i32
    return %c0_i32, %c0_i32_0 : i32, i32
  }
  func.func @transform_4(%arg0: i32) -> (i32, i32) {
    %c0_i32 = arith.constant 0 : i32
    %c0_i32_0 = arith.constant 0 : i32
    %c0_i32_1 = arith.constant 0 : i32
    return %c0_i32, %c0_i32_0 : i32, i32
  }
  func.func @transform_5(%arg0: i32) -> (i32, i32) {
    %c0_i32 = arith.constant 0 : i32
    %c0_i32_0 = arith.constant 0 : i32
    %c0_i32_1 = arith.constant 0 : i32
    return %c0_i32, %c0_i32_0 : i32, i32
  }
  func.func @transform_6(%arg0: i32) -> (i32, i32) {
    %c0_i32 = arith.constant 0 : i32
    %c0_i32_0 = arith.constant 0 : i32
    %c0_i32_1 = arith.constant 0 : i32
    return %c0_i32, %c0_i32_0 : i32, i32
  }
  func.func @transform_7(%arg0: i32) -> (i32, i32) {
    %c0_i32 = arith.constant 0 : i32
    %c0_i32_0 = arith.constant 0 : i32
    %c0_i32_1 = arith.constant 0 : i32
    return %c0_i32, %c0_i32_0 : i32, i32
  }
  func.func @transform_8(%arg0: i32) -> (i32, i32) {
    %c0_i32 = arith.constant 0 : i32
    %c0_i32_0 = arith.constant 0 : i32
    %c0_i32_1 = arith.constant 0 : i32
    return %c0_i32, %c0_i32_0 : i32, i32
  }
  func.func @transform_9(%arg0: i32) -> (i32, i32) {
    %c0_i32 = arith.constant 0 : i32
    %c0_i32_0 = arith.constant 0 : i32
    %c0_i32_1 = arith.constant 0 : i32
    return %c0_i32, %c0_i32_0 : i32, i32
  }
  func.func @transform_10(%arg0: i32) -> (i32, i32) {
    %c0_i32 = arith.constant 0 : i32
    %c0_i32_0 = arith.constant 0 : i32
    %c0_i32_1 = arith.constant 0 : i32
    return %c0_i32, %c0_i32_0 : i32, i32
  }
  func.func @transform_11(%arg0: i32) -> (i32, i32) {
    %c0_i32 = arith.constant 0 : i32
    %c0_i32_0 = arith.constant 0 : i32
    %c0_i32_1 = arith.constant 0 : i32
    return %c0_i32, %c0_i32_0 : i32, i32
  }
  func.func @transform_12(%arg0: i32) -> (i32, i32) {
    %c0_i32 = arith.constant 0 : i32
    %c0_i32_0 = arith.constant 0 : i32
    %c0_i32_1 = arith.constant 0 : i32
    return %c0_i32, %c0_i32_0 : i32, i32
  }
  func.func @transform_13(%arg0: i32) -> (i32, i32) {
    %c0_i32 = arith.constant 0 : i32
    %c0_i32_0 = arith.constant 0 : i32
    %c0_i32_1 = arith.constant 0 : i32
    return %c0_i32, %c0_i32_0 : i32, i32
  }
  func.func @transform_14(%arg0: i32) -> (i32, i32) {
    %c0_i32 = arith.constant 0 : i32
    %c0_i32_0 = arith.constant 0 : i32
    %c0_i32_1 = arith.constant 0 : i32
    return %c0_i32, %c0_i32_0 : i32, i32
  }
  func.func @transform_15(%arg0: i32) -> (i32, i32) {
    %c0_i32 = arith.constant 0 : i32
    %c0_i32_0 = arith.constant 0 : i32
    %c0_i32_1 = arith.constant 0 : i32
    return %c0_i32, %c0_i32_0 : i32, i32
  }
  func.func @transform_16(%arg0: i32) -> (i32, i32) {
    %c0_i32 = arith.constant 0 : i32
    %c0_i32_0 = arith.constant 0 : i32
    %c0_i32_1 = arith.constant 0 : i32
    return %c0_i32, %c0_i32_0 : i32, i32
  }
  func.func @transform_17(%arg0: i32) -> (i32, i32) {
    %c0_i32 = arith.constant 0 : i32
    %c0_i32_0 = arith.constant 0 : i32
    %c0_i32_1 = arith.constant 0 : i32
    return %c0_i32, %c0_i32_0 : i32, i32
  }
  func.func @transform_18(%arg0: i32) -> (i32, i32) {
    %c0_i32 = arith.constant 0 : i32
    %c0_i32_0 = arith.constant 0 : i32
    %c0_i32_1 = arith.constant 0 : i32
    return %c0_i32, %c0_i32_0 : i32, i32
  }
  func.func @transform_19(%arg0: i32) -> (i32, i32) {
    %c0_i32 = arith.constant 0 : i32
    %c0_i32_0 = arith.constant 0 : i32
    %c0_i32_1 = arith.constant 0 : i32
    return %c0_i32, %c0_i32_0 : i32, i32
  }
  func.func @transform_20(%arg0: i32) -> (i32, i32) {
    %c0_i32 = arith.constant 0 : i32
    %c0_i32_0 = arith.constant 0 : i32
    %c0_i32_1 = arith.constant 0 : i32
    return %c0_i32, %c0_i32_0 : i32, i32
  }
  func.func @transform_21(%arg0: i32) -> (i32, i32) {
    %c0_i32 = arith.constant 0 : i32
    %c0_i32_0 = arith.constant 0 : i32
    %c0_i32_1 = arith.constant 0 : i32
    return %c0_i32, %c0_i32_0 : i32, i32
  }
  func.func @transform_22(%arg0: i32) -> (i32, i32) {
    %c0_i32 = arith.constant 0 : i32
    %c0_i32_0 = arith.constant 0 : i32
    %c0_i32_1 = arith.constant 0 : i32
    return %c0_i32, %c0_i32_0 : i32, i32
  }
  func.func @transform_23(%arg0: i32) -> (i32, i32) {
    %c0_i32 = arith.constant 0 : i32
    %c0_i32_0 = arith.constant 0 : i32
    %c0_i32_1 = arith.constant 0 : i32
    return %c0_i32, %c0_i32_0 : i32, i32
  }
  func.func @transform_24(%arg0: i32) -> (i32, i32) {
    %c0_i32 = arith.constant 0 : i32
    %c0_i32_0 = arith.constant 0 : i32
    %c0_i32_1 = arith.constant 0 : i32
    return %c0_i32, %c0_i32_0 : i32, i32
  }
  func.func @transform_25(%arg0: i32) -> (i32, i32) {
    %c0_i32 = arith.constant 0 : i32
    %c0_i32_0 = arith.constant 0 : i32
    %c0_i32_1 = arith.constant 0 : i32
    return %c0_i32, %c0_i32_0 : i32, i32
  }
  func.func @transform_26(%arg0: i32) -> (i32, i32) {
    %c0_i32 = arith.constant 0 : i32
    %c0_i32_0 = arith.constant 0 : i32
    %c0_i32_1 = arith.constant 0 : i32
    return %c0_i32, %c0_i32_0 : i32, i32
  }
  func.func @transform_27(%arg0: i32) -> (i32, i32) {
    %c0_i32 = arith.constant 0 : i32
    %c0_i32_0 = arith.constant 0 : i32
    %c0_i32_1 = arith.constant 0 : i32
    return %c0_i32, %c0_i32_0 : i32, i32
  }
  func.func @transform_28(%arg0: i32) -> (i32, i32, i32) {
    %c0_i32 = arith.constant 0 : i32
    %c0_i32_0 = arith.constant 0 : i32
    %c0_i32_1 = arith.constant 0 : i32
    return %arg0, %c0_i32, %c0_i32_0 : i32, i32, i32
  }
}

</mosaic_0001>

<llo_original>
// kernel: tpu_custom_call.1
$region0: #{tpu_custom_call.1}
  #allocation0 [shape = 'u32[]', space=smem, size = 0x4, offset = 0x4, fixed_abs, tag = 'smem constant byte address 0x4 - core index']
  #allocation1 [shape = 'u32[72,128]{1,0:T(1,128)}', space=vmem, size = 0x9000, scoped, tag = 'internal scratch']
  %s0 = inlined_call_operand.hbm [shape: f32[2,8,32], index: 0, kind: input, shape index: {}]
  %s1 = inlined_call_operand.hbm [shape: f32[2,1,8], index: 1, kind: input, shape index: {}]
  %s2 = inlined_call_operand.hbm [shape: f32[1,32], index: 2, kind: input, shape index: {}]
  %s3 = inlined_call_operand.vmem [shape: f32[1,32], index: 3, kind: input, shape index: {}]
  %s4 = inlined_call_operand.vmem [shape: f32[32,96], index: 4, kind: input, shape index: {}]
  %s5 = inlined_call_operand.vmem [shape: f32[1,96], index: 5, kind: input, shape index: {}]
  %s6 = inlined_call_operand.vmem [shape: f32[32,32], index: 6, kind: input, shape index: {}]
  %s7 = inlined_call_operand.vmem [shape: f32[1,32], index: 7, kind: input, shape index: {}]
  %s8 = inlined_call_operand.vmem [shape: f32[1,32], index: 8, kind: input, shape index: {}]
  %s9 = inlined_call_operand.vmem [shape: f32[1,32], index: 9, kind: input, shape index: {}]
  %s10 = inlined_call_operand.vmem [shape: f32[32,64], index: 10, kind: input, shape index: {}]
  %s11 = inlined_call_operand.vmem [shape: f32[1,64], index: 11, kind: input, shape index: {}]
  %s12 = inlined_call_operand.vmem [shape: f32[64,32], index: 12, kind: input, shape index: {}]
  %s13 = inlined_call_operand.vmem [shape: f32[1,32], index: 13, kind: input, shape index: {}]
  %s14 = inlined_call_operand.vmem [shape: f32[1,32], index: 14, kind: input, shape index: {}]
  %s15 = inlined_call_operand.vmem [shape: f32[1,32], index: 15, kind: input, shape index: {}]
  %s16 = inlined_call_operand.vmem [shape: f32[32,96], index: 16, kind: input, shape index: {}]
  %s17 = inlined_call_operand.vmem [shape: f32[1,96], index: 17, kind: input, shape index: {}]
  %s18 = inlined_call_operand.vmem [shape: f32[32,32], index: 18, kind: input, shape index: {}]
  %s19 = inlined_call_operand.vmem [shape: f32[1,32], index: 19, kind: input, shape index: {}]
  %s20 = inlined_call_operand.vmem [shape: f32[1,32], index: 20, kind: input, shape index: {}]
  %s21 = inlined_call_operand.vmem [shape: f32[1,32], index: 21, kind: input, shape index: {}]
  %s22 = inlined_call_operand.hbm [shape: f32[32,64], index: 22, kind: input, shape index: {}]
  %s23 = inlined_call_operand.vmem [shape: f32[1,64], index: 23, kind: input, shape index: {}]
  %s24 = inlined_call_operand.vmem [shape: f32[64,32], index: 24, kind: input, shape index: {}]
  %s25 = inlined_call_operand.vmem [shape: f32[1,32], index: 25, kind: input, shape index: {}]
  %s26 = inlined_call_operand.vmem [shape: f32[1,32], index: 26, kind: input, shape index: {}]
  %s27 = inlined_call_operand.vmem [shape: f32[1,32], index: 27, kind: input, shape index: {}]
  %s28 = inlined_call_operand.hbm [shape: f32[2,8,32], index: 28, kind: output, shape index: {}]
  %s29 = sld [smem:[#allocation0]]
  $region161: #{tpu_custom_call.1} parent=0
    _
  %s31 = ssub.s32 1, %s29
  %s32 = scalar_select 0, %s31, %s29
  $region1: #{tpu_custom_call.1} parent=0
    #allocation2 [shape = 'u8[8192]{0}', space=vmem, size = 0x2000, scoped, tag = 'input window, operand 0']
    #allocation3 [shape = 's32[2]{0}', space=sflag, size = 0x8, scoped, tag = 'scoped memory for tpu_custom_call.1']
    #allocation4 [shape = 's32[2]{0}', space=sflag, size = 0x8, scoped, tag = 'scoped memory for tpu_custom_call.1']
    #allocation5 [shape = 'u8[1024]{0}', space=vmem, size = 0x400, scoped, tag = 'input window, operand 1']
    #allocation6 [shape = 's32[2]{0}', space=sflag, size = 0x8, scoped, tag = 'scoped memory for tpu_custom_call.1']
    #allocation7 [shape = 'u8[512]{0}', space=vmem, size = 0x400, scoped, tag = 'input window, operand 2, single buffered']
    #allocation8 [shape = 'u8[16384]{0}', space=vmem, size = 0x4000, scoped, tag = 'input window, operand 22, single buffered']
    #allocation9 [shape = 's32[1]{0}', space=sflag, size = 0x4, scoped, tag = 'scoped memory for tpu_custom_call.1']
    #allocation10 [shape = 'u8[8192]{0}', space=vmem, size = 0x2000, scoped, tag = 'output window, operand 0']
    %33 = vsyncpa [#allocation3], 0
    %s34 = scalar_lea.sflag [#allocation3], 1
    %35 = vsyncpa %s34, 0
    %36 = vsyncpa [#allocation6], 0
    %s37 = scalar_lea.sflag [#allocation6], 1
    %38 = vsyncpa %s37, 0
    %39 = vsyncpa [#allocation9], 0
    %40 = vsyncpa [#allocation4], 0
    %s41 = scalar_lea.sflag [#allocation4], 1
    %42 = vsyncpa %s41, 0
    loop: start=0, step=1, limit=4
    $region2: #{tpu_custom_call.1} parent=1 // loop_pre_header
      _
    $region3: #{tpu_custom_call.1} parent=1 // loop_header
      %s44 = sphi 0, %s48
      %p45 = scmp.ge.s32.totalorder %s44, 4
      %s54 = sphi 0, %s56
      %s57 = sphi 0, %s54
      %s58 = sphi 0, %s57
      %s74 = sphi 0, %s58
      %s80 = sphi 0, %s82
      %s83 = sphi 0, %s80
      %s84 = sphi 0, %s83
      %s100 = sphi 0, %s84
      %s104 = sphi 0, %s104
      %s106 = sphi 0, %s104
      %s107 = sphi 0, %s106
      %s121 = sphi 0, %s107
      %s125 = sphi 0, %s125
      %s127 = sphi 0, %s125
      %s128 = sphi 0, %s127
      %s142 = sphi 0, %s128
      %s146 = sphi 0, %s146
      %s148 = sphi 0, %s146
      %s149 = sphi 0, %s148
      %s163 = sphi 0, %s149
      %s167 = sphi 0, %s167
      %s169 = sphi 0, %s167
      %s170 = sphi 0, %s169
      %s184 = sphi 0, %s170
      %s188 = sphi 0, %s188
      %s190 = sphi 0, %s188
      %s191 = sphi 0, %s190
      %s205 = sphi 0, %s191
      %s209 = sphi 0, %s209
      %s211 = sphi 0, %s209
      %s212 = sphi 0, %s211
      %s226 = sphi 0, %s212
      %s230 = sphi 0, %s230
      %s232 = sphi 0, %s230
      %s233 = sphi 0, %s232
      %s247 = sphi 0, %s233
      %s251 = sphi 0, %s251
      %s253 = sphi 0, %s251
      %s254 = sphi 0, %s253
      %s268 = sphi 0, %s254
      %s272 = sphi 0, %s272
      %s274 = sphi 0, %s272
      %s275 = sphi 0, %s274
      %s289 = sphi 0, %s275
      %s293 = sphi 0, %s293
      %s295 = sphi 0, %s293
      %s296 = sphi 0, %s295
      %s310 = sphi 0, %s296
      %s314 = sphi 0, %s314
      %s316 = sphi 0, %s314
      %s317 = sphi 0, %s316
      %s331 = sphi 0, %s317
      %s335 = sphi 0, %s335
      %s337 = sphi 0, %s335
      %s338 = sphi 0, %s337
      %s352 = sphi 0, %s338
      %s356 = sphi 0, %s356
      %s358 = sphi 0, %s356
      %s359 = sphi 0, %s358
      %s373 = sphi 0, %s359
      %s377 = sphi 0, %s377
      %s379 = sphi 0, %s377
      %s380 = sphi 0, %s379
      %s394 = sphi 0, %s380
      %s398 = sphi 0, %s398
      %s400 = sphi 0, %s398
      %s401 = sphi 0, %s400
      %s415 = sphi 0, %s401
      %s419 = sphi 0, %s419
      %s421 = sphi 0, %s419
      %s422 = sphi 0, %s421
      %s436 = sphi 0, %s422
      %s440 = sphi 0, %s440
      %s442 = sphi 0, %s440
      %s443 = sphi 0, %s442
      %s457 = sphi 0, %s443
      %s461 = sphi 0, %s461
      %s463 = sphi 0, %s461
      %s464 = sphi 0, %s463
      %s478 = sphi 0, %s464
      %s482 = sphi 0, %s482
      %s484 = sphi 0, %s482
      %s485 = sphi 0, %s484
      %s499 = sphi 0, %s485
      %s503 = sphi 0, %s503
      %s505 = sphi 0, %s503
      %s506 = sphi 0, %s505
      %s520 = sphi 0, %s506
      %s524 = sphi 0, %s524
      %s526 = sphi 0, %s524
      %s527 = sphi 0, %s526
      %s541 = sphi 0, %s527
      %s545 = sphi 0, %s545
      %s547 = sphi 0, %s545
      %s548 = sphi 0, %s547
      %s562 = sphi 0, %s548
      %s566 = sphi 0, %s566
      %s568 = sphi 0, %s566
      %s569 = sphi 0, %s568
      %s583 = sphi 0, %s569
      %s587 = sphi 0, %s587
      %s589 = sphi 0, %s587
      %s590 = sphi 0, %s589
      %s604 = sphi 0, %s590
      %s608 = sphi 0, %s608
      %s610 = sphi 0, %s608
      %s611 = sphi 0, %s610
      %s625 = sphi 0, %s611
      %s629 = sphi 0, %s629
      %s631 = sphi 0, %s629
      %s632 = sphi 0, %s631
      %s646 = sphi 0, %s632
      %s652 = sphi 0, %s654
      %s655 = sphi 0, %s652
      %s656 = sphi 0, %s655
      %s672 = sphi 0, %s656
    $region4: #{tpu_custom_call.1} parent=1 // loop_header_branch
      %47 = sbr.rel (%p45) target = $region8
    $region5: #{tpu_custom_call.1} parent=1 // loop_body
      %s49 = ssub.s32 %s44, 1
      %s50 = ssub.s32 %s44, 2
      %s51 = sadd.s32 %s44, 1
      %s52 = ssub.s32 %s44, %s51
      %p53 = scmp.eq.s32.totalorder %s52, 0
      %s55 = sadd.s32 %s54, 1
      %s56 = scalar_select %p53, %s54, %s55
      %p59 = pneg %p53
      %p60 = scmp.eq.s32.totalorder %s44, 1
      %p61 = por %p59, %p60
      %p62 = scmp.ne.s32.totalorder %s54, %s57
      %p63 = scmp.eq.s32.totalorder %s44, 0
      %p64 = por %p62, %p63
      %p65 = scmp.ne.s32.totalorder %s54, %s57
      %p66 = scmp.eq.s32.totalorder %s49, 1
      %p67 = por %p65, %p66
      %p68 = scmp.ne.s32.totalorder %s57, %s58
      %p69 = scmp.eq.s32.totalorder %s49, 0
      %p70 = por %p68, %p69
      %p71 = scmp.ne.s32.totalorder %s57, %s58
      %p72 = scmp.eq.s32.totalorder %s50, 1
      %p73 = por %p71, %p72
      %p75 = scmp.ne.s32.totalorder %s58, %s74
      %p76 = scmp.eq.s32.totalorder %s50, 0
      %p77 = por %p75, %p76
      %s78 = ssub.s32 %s44, %s51
      %p79 = scmp.eq.s32.totalorder %s78, 0
      %s81 = sadd.s32 %s80, 1
      %s82 = scalar_select %p79, %s80, %s81
      %p85 = pneg %p79
      %p86 = scmp.eq.s32.totalorder %s44, 1
      %p87 = por %p85, %p86
      %p88 = scmp.ne.s32.totalorder %s80, %s83
      %p89 = scmp.eq.s32.totalorder %s44, 0
      %p90 = por %p88, %p89
      %p91 = scmp.ne.s32.totalorder %s80, %s83
      %p92 = scmp.eq.s32.totalorder %s49, 1
      %p93 = por %p91, %p92
      %p94 = scmp.ne.s32.totalorder %s83, %s84
      %p95 = scmp.eq.s32.totalorder %s49, 0
      %p96 = por %p94, %p95
      %p97 = scmp.ne.s32.totalorder %s83, %s84
      %p98 = scmp.eq.s32.totalorder %s50, 1
      %p99 = por %p97, %p98
      %p101 = scmp.ne.s32.totalorder %s84, %s100
      %p102 = scmp.eq.s32.totalorder %s50, 0
      %p103 = por %p101, %p102
      %s105 = sadd.s32 %s104, 1
      %p108 = scmp.eq.s32.totalorder %s44, 1
      %p109 = scmp.ne.s32.totalorder %s104, %s106
      %p110 = scmp.eq.s32.totalorder %s44, 0
      %p111 = por %p109, %p110
      %p112 = scmp.ne.s32.totalorder %s104, %s106
      %p113 = scmp.eq.s32.totalorder %s49, 1
      %p114 = por %p112, %p113
      %p115 = scmp.ne.s32.totalorder %s106, %s107
      %p116 = scmp.eq.s32.totalorder %s49, 0
      %p117 = por %p115, %p116
      %p118 = scmp.ne.s32.totalorder %s106, %s107
      %p119 = scmp.eq.s32.totalorder %s50, 1
      %p120 = por %p118, %p119
      %p122 = scmp.ne.s32.totalorder %s107, %s121
      %p123 = scmp.eq.s32.totalorder %s50, 0
      %p124 = por %p122, %p123
      %s126 = sadd.s32 %s125, 1
      %p129 = scmp.eq.s32.totalorder %s44, 1
      %p130 = scmp.ne.s32.totalorder %s125, %s127
      %p131 = scmp.eq.s32.totalorder %s44, 0
      %p132 = por %p130, %p131
      %p133 = scmp.ne.s32.totalorder %s125, %s127
      %p134 = scmp.eq.s32.totalorder %s49, 1
      %p135 = por %p133, %p134
      %p136 = scmp.ne.s32.totalorder %s127, %s128
      %p137 = scmp.eq.s32.totalorder %s49, 0
      %p138 = por %p136, %p137
      %p139 = scmp.ne.s32.totalorder %s127, %s128
      %p140 = scmp.eq.s32.totalorder %s50, 1
      %p141 = por %p139, %p140
      %p143 = scmp.ne.s32.totalorder %s128, %s142
      %p144 = scmp.eq.s32.totalorder %s50, 0
      %p145 = por %p143, %p144
      %s147 = sadd.s32 %s146, 1
      %p150 = scmp.eq.s32.totalorder %s44, 1
      %p151 = scmp.ne.s32.totalorder %s146, %s148
      %p152 = scmp.eq.s32.totalorder %s44, 0
      %p153 = por %p151, %p152
      %p154 = scmp.ne.s32.totalorder %s146, %s148
      %p155 = scmp.eq.s32.totalorder %s49, 1
      %p156 = por %p154, %p155
      %p157 = scmp.ne.s32.totalorder %s148, %s149
      %p158 = scmp.eq.s32.totalorder %s49, 0
      %p159 = por %p157, %p158
      %p160 = scmp.ne.s32.totalorder %s148, %s149
      %p161 = scmp.eq.s32.totalorder %s50, 1
      %p162 = por %p160, %p161
      %p164 = scmp.ne.s32.totalorder %s149, %s163
      %p165 = scmp.eq.s32.totalorder %s50, 0
      %p166 = por %p164, %p165
      %s168 = sadd.s32 %s167, 1
      %p171 = scmp.eq.s32.totalorder %s44, 1
      %p172 = scmp.ne.s32.totalorder %s167, %s169
      %p173 = scmp.eq.s32.totalorder %s44, 0
      %p174 = por %p172, %p173
      %p175 = scmp.ne.s32.totalorder %s167, %s169
      %p176 = scmp.eq.s32.totalorder %s49, 1
      %p177 = por %p175, %p176
      %p178 = scmp.ne.s32.totalorder %s169, %s170
      %p179 = scmp.eq.s32.totalorder %s49, 0
      %p180 = por %p178, %p179
      %p181 = scmp.ne.s32.totalorder %s169, %s170
      %p182 = scmp.eq.s32.totalorder %s50, 1
      %p183 = por %p181, %p182
      %p185 = scmp.ne.s32.totalorder %s170, %s184
      %p186 = scmp.eq.s32.totalorder %s50, 0
      %p187 = por %p185, %p186
      %s189 = sadd.s32 %s188, 1
      %p192 = scmp.eq.s32.totalorder %s44, 1
      %p193 = scmp.ne.s32.totalorder %s188, %s190
      %p194 = scmp.eq.s32.totalorder %s44, 0
      %p195 = por %p193, %p194
      %p196 = scmp.ne.s32.totalorder %s188, %s190
      %p197 = scmp.eq.s32.totalorder %s49, 1
      %p198 = por %p196, %p197
      %p199 = scmp.ne.s32.totalorder %s190, %s191
      %p200 = scmp.eq.s32.totalorder %s49, 0
      %p201 = por %p199, %p200
      %p202 = scmp.ne.s32.totalorder %s190, %s191
      %p203 = scmp.eq.s32.totalorder %s50, 1
      %p204 = por %p202, %p203
      %p206 = scmp.ne.s32.totalorder %s191, %s205
      %p207 = scmp.eq.s32.totalorder %s50, 0
      %p208 = por %p206, %p207
      %s210 = sadd.s32 %s209, 1
      %p213 = scmp.eq.s32.totalorder %s44, 1
      %p214 = scmp.ne.s32.totalorder %s209, %s211
      %p215 = scmp.eq.s32.totalorder %s44, 0
      %p216 = por %p214, %p215
      %p217 = scmp.ne.s32.totalorder %s209, %s211
      %p218 = scmp.eq.s32.totalorder %s49, 1
      %p219 = por %p217, %p218
      %p220 = scmp.ne.s32.totalorder %s211, %s212
      %p221 = scmp.eq.s32.totalorder %s49, 0
      %p222 = por %p220, %p221
      %p223 = scmp.ne.s32.totalorder %s211, %s212
      %p224 = scmp.eq.s32.totalorder %s50, 1
      %p225 = por %p223, %p224
      %p227 = scmp.ne.s32.totalorder %s212, %s226
      %p228 = scmp.eq.s32.totalorder %s50, 0
      %p229 = por %p227, %p228
      %s231 = sadd.s32 %s230, 1
      %p234 = scmp.eq.s32.totalorder %s44, 1
      %p235 = scmp.ne.s32.totalorder %s230, %s232
      %p236 = scmp.eq.s32.totalorder %s44, 0
      %p237 = por %p235, %p236
      %p238 = scmp.ne.s32.totalorder %s230, %s232
      %p239 = scmp.eq.s32.totalorder %s49, 1
      %p240 = por %p238, %p239
      %p241 = scmp.ne.s32.totalorder %s232, %s233
      %p242 = scmp.eq.s32.totalorder %s49, 0
      %p243 = por %p241, %p242
      %p244 = scmp.ne.s32.totalorder %s232, %s233
      %p245 = scmp.eq.s32.totalorder %s50, 1
      %p246 = por %p244, %p245
      %p248 = scmp.ne.s32.totalorder %s233, %s247
      %p249 = scmp.eq.s32.totalorder %s50, 0
      %p250 = por %p248, %p249
      %s252 = sadd.s32 %s251, 1
      %p255 = scmp.eq.s32.totalorder %s44, 1
      %p256 = scmp.ne.s32.totalorder %s251, %s253
      %p257 = scmp.eq.s32.totalorder %s44, 0
      %p258 = por %p256, %p257
      %p259 = scmp.ne.s32.totalorder %s251, %s253
      %p260 = scmp.eq.s32.totalorder %s49, 1
      %p261 = por %p259, %p260
      %p262 = scmp.ne.s32.totalorder %s253, %s254
      %p263 = scmp.eq.s32.totalorder %s49, 0
      %p264 = por %p262, %p263
      %p265 = scmp.ne.s32.totalorder %s253, %s254
      %p266 = scmp.eq.s32.totalorder %s50, 1
      %p267 = por %p265, %p266
      %p269 = scmp.ne.s32.totalorder %s254, %s268
      %p270 = scmp.eq.s32.totalorder %s50, 0
      %p271 = por %p269, %p270
      %s273 = sadd.s32 %s272, 1
      %p276 = scmp.eq.s32.totalorder %s44, 1
      %p277 = scmp.ne.s32.totalorder %s272, %s274
      %p278 = scmp.eq.s32.totalorder %s44, 0
      %p279 = por %p277, %p278
      %p280 = scmp.ne.s32.totalorder %s272, %s274
      %p281 = scmp.eq.s32.totalorder %s49, 1
      %p282 = por %p280, %p281
      %p283 = scmp.ne.s32.totalorder %s274, %s275
      %p284 = scmp.eq.s32.totalorder %s49, 0
      %p285 = por %p283, %p284
      %p286 = scmp.ne.s32.totalorder %s274, %s275
      %p287 = scmp.eq.s32.totalorder %s50, 1
      %p288 = por %p286, %p287
      %p290 = scmp.ne.s32.totalorder %s275, %s289
      %p291 = scmp.eq.s32.totalorder %s50, 0
      %p292 = por %p290, %p291
      %s294 = sadd.s32 %s293, 1
      %p297 = scmp.eq.s32.totalorder %s44, 1
      %p298 = scmp.ne.s32.totalorder %s293, %s295
      %p299 = scmp.eq.s32.totalorder %s44, 0
      %p300 = por %p298, %p299
      %p301 = scmp.ne.s32.totalorder %s293, %s295
      %p302 = scmp.eq.s32.totalorder %s49, 1
      %p303 = por %p301, %p302
      %p304 = scmp.ne.s32.totalorder %s295, %s296
      %p305 = scmp.eq.s32.totalorder %s49, 0
      %p306 = por %p304, %p305
      %p307 = scmp.ne.s32.totalorder %s295, %s296
      %p308 = scmp.eq.s32.totalorder %s50, 1
      %p309 = por %p307, %p308
      %p311 = scmp.ne.s32.totalorder %s296, %s310
      %p312 = scmp.eq.s32.totalorder %s50, 0
      %p313 = por %p311, %p312
      %s315 = sadd.s32 %s314, 1
      %p318 = scmp.eq.s32.totalorder %s44, 1
      %p319 = scmp.ne.s32.totalorder %s314, %s316
      %p320 = scmp.eq.s32.totalorder %s44, 0
      %p321 = por %p319, %p320
      %p322 = scmp.ne.s32.totalorder %s314, %s316
      %p323 = scmp.eq.s32.totalorder %s49, 1
      %p324 = por %p322, %p323
      %p325 = scmp.ne.s32.totalorder %s316, %s317
      %p326 = scmp.eq.s32.totalorder %s49, 0
      %p327 = por %p325, %p326
      %p328 = scmp.ne.s32.totalorder %s316, %s317
      %p329 = scmp.eq.s32.totalorder %s50, 1
      %p330 = por %p328, %p329
      %p332 = scmp.ne.s32.totalorder %s317, %s331
      %p333 = scmp.eq.s32.totalorder %s50, 0
      %p334 = por %p332, %p333
      %s336 = sadd.s32 %s335, 1
      %p339 = scmp.eq.s32.totalorder %s44, 1
      %p340 = scmp.ne.s32.totalorder %s335, %s337
      %p341 = scmp.eq.s32.totalorder %s44, 0
      %p342 = por %p340, %p341
      %p343 = scmp.ne.s32.totalorder %s335, %s337
      %p344 = scmp.eq.s32.totalorder %s49, 1
      %p345 = por %p343, %p344
      %p346 = scmp.ne.s32.totalorder %s337, %s338
      %p347 = scmp.eq.s32.totalorder %s49, 0
      %p348 = por %p346, %p347
      %p349 = scmp.ne.s32.totalorder %s337, %s338
      %p350 = scmp.eq.s32.totalorder %s50, 1
      %p351 = por %p349, %p350
      %p353 = scmp.ne.s32.totalorder %s338, %s352
      %p354 = scmp.eq.s32.totalorder %s50, 0
      %p355 = por %p353, %p354
      %s357 = sadd.s32 %s356, 1
      %p360 = scmp.eq.s32.totalorder %s44, 1
      %p361 = scmp.ne.s32.totalorder %s356, %s358
      %p362 = scmp.eq.s32.totalorder %s44, 0
      %p363 = por %p361, %p362
      %p364 = scmp.ne.s32.totalorder %s356, %s358
      %p365 = scmp.eq.s32.totalorder %s49, 1
      %p366 = por %p364, %p365
      %p367 = scmp.ne.s32.totalorder %s358, %s359
      %p368 = scmp.eq.s32.totalorder %s49, 0
      %p369 = por %p367, %p368
      %p370 = scmp.ne.s32.totalorder %s358, %s359
      %p371 = scmp.eq.s32.totalorder %s50, 1
      %p372 = por %p370, %p371
      %p374 = scmp.ne.s32.totalorder %s359, %s373
      %p375 = scmp.eq.s32.totalorder %s50, 0
      %p376 = por %p374, %p375
      %s378 = sadd.s32 %s377, 1
      %p381 = scmp.eq.s32.totalorder %s44, 1
      %p382 = scmp.ne.s32.totalorder %s377, %s379
      %p383 = scmp.eq.s32.totalorder %s44, 0
      %p384 = por %p382, %p383
      %p385 = scmp.ne.s32.totalorder %s377, %s379
      %p386 = scmp.eq.s32.totalorder %s49, 1
      %p387 = por %p385, %p386
      %p388 = scmp.ne.s32.totalorder %s379, %s380
      %p389 = scmp.eq.s32.totalorder %s49, 0
      %p390 = por %p388, %p389
      %p391 = scmp.ne.s32.totalorder %s379, %s380
      %p392 = scmp.eq.s32.totalorder %s50, 1
      %p393 = por %p391, %p392
      %p395 = scmp.ne.s32.totalorder %s380, %s394
      %p396 = scmp.eq.s32.totalorder %s50, 0
      %p397 = por %p395, %p396
      %s399 = sadd.s32 %s398, 1
      %p402 = scmp.eq.s32.totalorder %s44, 1
      %p403 = scmp.ne.s32.totalorder %s398, %s400
      %p404 = scmp.eq.s32.totalorder %s44, 0
      %p405 = por %p403, %p404
      %p406 = scmp.ne.s32.totalorder %s398, %s400
      %p407 = scmp.eq.s32.totalorder %s49, 1
      %p408 = por %p406, %p407
      %p409 = scmp.ne.s32.totalorder %s400, %s401
      %p410 = scmp.eq.s32.totalorder %s49, 0
      %p411 = por %p409, %p410
      %p412 = scmp.ne.s32.totalorder %s400, %s401
      %p413 = scmp.eq.s32.totalorder %s50, 1
      %p414 = por %p412, %p413
      %p416 = scmp.ne.s32.totalorder %s401, %s415
      %p417 = scmp.eq.s32.totalorder %s50, 0
      %p418 = por %p416, %p417
      %s420 = sadd.s32 %s419, 1
      %p423 = scmp.eq.s32.totalorder %s44, 1
      %p424 = scmp.ne.s32.totalorder %s419, %s421
      %p425 = scmp.eq.s32.totalorder %s44, 0
      %p426 = por %p424, %p425
      %p427 = scmp.ne.s32.totalorder %s419, %s421
      %p428 = scmp.eq.s32.totalorder %s49, 1
      %p429 = por %p427, %p428
      %p430 = scmp.ne.s32.totalorder %s421, %s422
      %p431 = scmp.eq.s32.totalorder %s49, 0
      %p432 = por %p430, %p431
      %p433 = scmp.ne.s32.totalorder %s421, %s422
      %p434 = scmp.eq.s32.totalorder %s50, 1
      %p435 = por %p433, %p434
      %p437 = scmp.ne.s32.totalorder %s422, %s436
      %p438 = scmp.eq.s32.totalorder %s50, 0
      %p439 = por %p437, %p438
      %s441 = sadd.s32 %s440, 1
      %p444 = scmp.eq.s32.totalorder %s44, 1
      %p445 = scmp.ne.s32.totalorder %s440, %s442
      %p446 = scmp.eq.s32.totalorder %s44, 0
      %p447 = por %p445, %p446
      %p448 = scmp.ne.s32.totalorder %s440, %s442
      %p449 = scmp.eq.s32.totalorder %s49, 1
      %p450 = por %p448, %p449
      %p451 = scmp.ne.s32.totalorder %s442, %s443
      %p452 = scmp.eq.s32.totalorder %s49, 0
      %p453 = por %p451, %p452
      %p454 = scmp.ne.s32.totalorder %s442, %s443
      %p455 = scmp.eq.s32.totalorder %s50, 1
      %p456 = por %p454, %p455
      %p458 = scmp.ne.s32.totalorder %s443, %s457
      %p459 = scmp.eq.s32.totalorder %s50, 0
      %p460 = por %p458, %p459
      %s462 = sadd.s32 %s461, 1
      %p465 = scmp.eq.s32.totalorder %s44, 1
      %p466 = scmp.ne.s32.totalorder %s461, %s463
      %p467 = scmp.eq.s32.totalorder %s44, 0
      %p468 = por %p466, %p467
      %p469 = scmp.ne.s32.totalorder %s461, %s463
      %p470 = scmp.eq.s32.totalorder %s49, 1
      %p471 = por %p469, %p470
      %p472 = scmp.ne.s32.totalorder %s463, %s464
      %p473 = scmp.eq.s32.totalorder %s49, 0
      %p474 = por %p472, %p473
      %p475 = scmp.ne.s32.totalorder %s463, %s464
      %p476 = scmp.eq.s32.totalorder %s50, 1
      %p477 = por %p475, %p476
      %p479 = scmp.ne.s32.totalorder %s464, %s478
      %p480 = scmp.eq.s32.totalorder %s50, 0
      %p481 = por %p479, %p480
      %s483 = sadd.s32 %s482, 1
      %p486 = scmp.eq.s32.totalorder %s44, 1
      %p487 = scmp.ne.s32.totalorder %s482, %s484
      %p488 = scmp.eq.s32.totalorder %s44, 0
      %p489 = por %p487, %p488
      %p490 = scmp.ne.s32.totalorder %s482, %s484
      %p491 = scmp.eq.s32.totalorder %s49, 1
      %p492 = por %p490, %p491
      %p493 = scmp.ne.s32.totalorder %s484, %s485
      %p494 = scmp.eq.s32.totalorder %s49, 0
      %p495 = por %p493, %p494
      %p496 = scmp.ne.s32.totalorder %s484, %s485
      %p497 = scmp.eq.s32.totalorder %s50, 1
      %p498 = por %p496, %p497
      %p500 = scmp.ne.s32.totalorder %s485, %s499
      %p501 = scmp.eq.s32.totalorder %s50, 0
      %p502 = por %p500, %p501
      %s504 = sadd.s32 %s503, 1
      %p507 = scmp.eq.s32.totalorder %s44, 1
      %p508 = scmp.ne.s32.totalorder %s503, %s505
      %p509 = scmp.eq.s32.totalorder %s44, 0
      %p510 = por %p508, %p509
      %p511 = scmp.ne.s32.totalorder %s503, %s505
      %p512 = scmp.eq.s32.totalorder %s49, 1
      %p513 = por %p511, %p512
      %p514 = scmp.ne.s32.totalorder %s505, %s506
      %p515 = scmp.eq.s32.totalorder %s49, 0
      %p516 = por %p514, %p515
      %p517 = scmp.ne.s32.totalorder %s505, %s506
      %p518 = scmp.eq.s32.totalorder %s50, 1
      %p519 = por %p517, %p518
      %p521 = scmp.ne.s32.totalorder %s506, %s520
      %p522 = scmp.eq.s32.totalorder %s50, 0
      %p523 = por %p521, %p522
      %s525 = sadd.s32 %s524, 1
      %p528 = scmp.eq.s32.totalorder %s44, 1
      %p529 = scmp.ne.s32.totalorder %s524, %s526
      %p530 = scmp.eq.s32.totalorder %s44, 0
      %p531 = por %p529, %p530
      %p532 = scmp.ne.s32.totalorder %s524, %s526
      %p533 = scmp.eq.s32.totalorder %s49, 1
      %p534 = por %p532, %p533
      %p535 = scmp.ne.s32.totalorder %s526, %s527
      %p536 = scmp.eq.s32.totalorder %s49, 0
      %p537 = por %p535, %p536
      %p538 = scmp.ne.s32.totalorder %s526, %s527
      %p539 = scmp.eq.s32.totalorder %s50, 1
      %p540 = por %p538, %p539
      %p542 = scmp.ne.s32.totalorder %s527, %s541
      %p543 = scmp.eq.s32.totalorder %s50, 0
      %p544 = por %p542, %p543
      %s546 = sadd.s32 %s545, 1
      %p549 = scmp.eq.s32.totalorder %s44, 1
      %p550 = scmp.ne.s32.totalorder %s545, %s547
      %p551 = scmp.eq.s32.totalorder %s44, 0
      %p552 = por %p550, %p551
      %p553 = scmp.ne.s32.totalorder %s545, %s547
      %p554 = scmp.eq.s32.totalorder %s49, 1
      %p555 = por %p553, %p554
      %p556 = scmp.ne.s32.totalorder %s547, %s548
      %p557 = scmp.eq.s32.totalorder %s49, 0
      %p558 = por %p556, %p557
      %p559 = scmp.ne.s32.totalorder %s547, %s548
      %p560 = scmp.eq.s32.totalorder %s50, 1
      %p561 = por %p559, %p560
      %p563 = scmp.ne.s32.totalorder %s548, %s562
      %p564 = scmp.eq.s32.totalorder %s50, 0
      %p565 = por %p563, %p564
      %s567 = sadd.s32 %s566, 1
      %p570 = scmp.eq.s32.totalorder %s44, 1
      %p571 = scmp.ne.s32.totalorder %s566, %s568
      %p572 = scmp.eq.s32.totalorder %s44, 0
      %p573 = por %p571, %p572
      %p574 = scmp.ne.s32.totalorder %s566, %s568
      %p575 = scmp.eq.s32.totalorder %s49, 1
      %p576 = por %p574, %p575
      %p577 = scmp.ne.s32.totalorder %s568, %s569
      %p578 = scmp.eq.s32.totalorder %s49, 0
      %p579 = por %p577, %p578
      %p580 = scmp.ne.s32.totalorder %s568, %s569
      %p581 = scmp.eq.s32.totalorder %s50, 1
      %p582 = por %p580, %p581
      %p584 = scmp.ne.s32.totalorder %s569, %s583
      %p585 = scmp.eq.s32.totalorder %s50, 0
      %p586 = por %p584, %p585
      %s588 = sadd.s32 %s587, 1
      %p591 = scmp.eq.s32.totalorder %s44, 1
      %p592 = scmp.ne.s32.totalorder %s587, %s589
      %p593 = scmp.eq.s32.totalorder %s44, 0
      %p594 = por %p592, %p593
      %p595 = scmp.ne.s32.totalorder %s587, %s589
      %p596 = scmp.eq.s32.totalorder %s49, 1
      %p597 = por %p595, %p596
      %p598 = scmp.ne.s32.totalorder %s589, %s590
      %p599 = scmp.eq.s32.totalorder %s49, 0
      %p600 = por %p598, %p599
      %p601 = scmp.ne.s32.totalorder %s589, %s590
      %p602 = scmp.eq.s32.totalorder %s50, 1
      %p603 = por %p601, %p602
      %p605 = scmp.ne.s32.totalorder %s590, %s604
      %p606 = scmp.eq.s32.totalorder %s50, 0
      %p607 = por %p605, %p606
      %s609 = sadd.s32 %s608, 1
      %p612 = scmp.eq.s32.totalorder %s44, 1
      %p613 = scmp.ne.s32.totalorder %s608, %s610
      %p614 = scmp.eq.s32.totalorder %s44, 0
      %p615 = por %p613, %p614
      %p616 = scmp.ne.s32.totalorder %s608, %s610
      %p617 = scmp.eq.s32.totalorder %s49, 1
      %p618 = por %p616, %p617
      %p619 = scmp.ne.s32.totalorder %s610, %s611
      %p620 = scmp.eq.s32.totalorder %s49, 0
      %p621 = por %p619, %p620
      %p622 = scmp.ne.s32.totalorder %s610, %s611
      %p623 = scmp.eq.s32.totalorder %s50, 1
      %p624 = por %p622, %p623
      %p626 = scmp.ne.s32.totalorder %s611, %s625
      %p627 = scmp.eq.s32.totalorder %s50, 0
      %p628 = por %p626, %p627
      %s630 = sadd.s32 %s629, 1
      %p633 = scmp.eq.s32.totalorder %s44, 1
      %p634 = scmp.ne.s32.totalorder %s629, %s631
      %p635 = scmp.eq.s32.totalorder %s44, 0
      %p636 = por %p634, %p635
      %p637 = scmp.ne.s32.totalorder %s629, %s631
      %p638 = scmp.eq.s32.totalorder %s49, 1
      %p639 = por %p637, %p638
      %p640 = scmp.ne.s32.totalorder %s631, %s632
      %p641 = scmp.eq.s32.totalorder %s49, 0
      %p642 = por %p640, %p641
      %p643 = scmp.ne.s32.totalorder %s631, %s632
      %p644 = scmp.eq.s32.totalorder %s50, 1
      %p645 = por %p643, %p644
      %p647 = scmp.ne.s32.totalorder %s632, %s646
      %p648 = scmp.eq.s32.totalorder %s50, 0
      %p649 = por %p647, %p648
      %s650 = ssub.s32 %s44, %s51
      %p651 = scmp.eq.s32.totalorder %s650, 0
      %s653 = sadd.s32 %s652, 1
      %s654 = scalar_select %p651, %s652, %s653
      %p657 = pneg %p651
      %p658 = scmp.eq.s32.totalorder %s44, 1
      %p659 = por %p657, %p658
      %p660 = scmp.ne.s32.totalorder %s652, %s655
      %p661 = scmp.eq.s32.totalorder %s44, 0
      %p662 = por %p660, %p661
      %p663 = scmp.ne.s32.totalorder %s652, %s655
      %p664 = scmp.eq.s32.totalorder %s49, 1
      %p665 = por %p663, %p664
      %p666 = scmp.ne.s32.totalorder %s655, %s656
      %p667 = scmp.eq.s32.totalorder %s49, 0
      %p668 = por %p666, %p667
      %p669 = scmp.ne.s32.totalorder %s655, %s656
      %p670 = scmp.eq.s32.totalorder %s50, 1
      %p671 = por %p669, %p670
      %p673 = scmp.ne.s32.totalorder %s656, %s672
      %p674 = scmp.eq.s32.totalorder %s50, 0
      %p675 = por %p673, %p674
      %p676 = scmp.le.s32.totalorder 1, %s44
      %p677 = scmp.lt.s32.totalorder %s44, 3
      %p678 = pnand %p676, %p677
      %p679 = pneg %p678
      // Predicated region
      $region9: #{tpu_custom_call.1} parent=5 // pred_check
        _
      $region10: #{tpu_custom_call.1} parent=5 // pred_check_branch
        %681 = sbr.rel (%p678) target = $region12
      $region11: #{tpu_custom_call.1} parent=5 // pred_region
        %s682 = ssub.s32 %s44, 1
        // Predicated region
        $region13: #{tpu_custom_call.1} parent=11 // pred_check
          %p683 = pneg %p117
        $region14: #{tpu_custom_call.1} parent=11 // pred_check_branch
          %685 = sbr.rel (%p683) target = $region16
        $region15: #{tpu_custom_call.1} parent=11 // pred_region
          %687 = vsyncadd [#allocation6], 0
          %s689 = sshll.u32 %s2, 4
          %s690 = int_to_ptr.hbm [resolvable:$true] %s689
          %s691 = sshll.u32 [#allocation7], 4
          %s692 = int_to_ptr.vmem [resolvable:$true] %s691
          %694 = dma.hbm_to_vmem [thread:$0]  %s690, 16, %s692, [#allocation6]
        $region16: #{tpu_custom_call.1} parent=11 // pred_fallthru
          _
        // Predicated region
        $region17: #{tpu_custom_call.1} parent=11 // pred_check
          %p695 = pneg %p138
        $region18: #{tpu_custom_call.1} parent=11 // pred_check_branch
          %697 = sbr.rel (%p695) target = $region20
        $region19: #{tpu_custom_call.1} parent=11 // pred_region
          _
        $region20: #{tpu_custom_call.1} parent=11 // pred_fallthru
          _
        // Predicated region
        $region21: #{tpu_custom_call.1} parent=11 // pred_check
          %p698 = pneg %p159
        $region22: #{tpu_custom_call.1} parent=11 // pred_check_branch
          %700 = sbr.rel (%p698) target = $region24
        $region23: #{tpu_custom_call.1} parent=11 // pred_region
          _
        $region24: #{tpu_custom_call.1} parent=11 // pred_fallthru
          _
        // Predicated region
        $region25: #{tpu_custom_call.1} parent=11 // pred_check
          %p701 = pneg %p180
        $region26: #{tpu_custom_call.1} parent=11 // pred_check_branch
          %703 = sbr.rel (%p701) target = $region28
        $region27: #{tpu_custom_call.1} parent=11 // pred_region
          _
        $region28: #{tpu_custom_call.1} parent=11 // pred_fallthru
          _
        // Predicated region
        $region29: #{tpu_custom_call.1} parent=11 // pred_check
          %p704 = pneg %p201
        $region30: #{tpu_custom_call.1} parent=11 // pred_check_branch
          %706 = sbr.rel (%p704) target = $region32
        $region31: #{tpu_custom_call.1} parent=11 // pred_region
          _
        $region32: #{tpu_custom_call.1} parent=11 // pred_fallthru
          _
        // Predicated region
        $region33: #{tpu_custom_call.1} parent=11 // pred_check
          %p707 = pneg %p222
        $region34: #{tpu_custom_call.1} parent=11 // pred_check_branch
          %709 = sbr.rel (%p707) target = $region36
        $region35: #{tpu_custom_call.1} parent=11 // pred_region
          _
        $region36: #{tpu_custom_call.1} parent=11 // pred_fallthru
          _
        // Predicated region
        $region37: #{tpu_custom_call.1} parent=11 // pred_check
          %p710 = pneg %p243
        $region38: #{tpu_custom_call.1} parent=11 // pred_check_branch
          %712 = sbr.rel (%p710) target = $region40
        $region39: #{tpu_custom_call.1} parent=11 // pred_region
          _
        $region40: #{tpu_custom_call.1} parent=11 // pred_fallthru
          _
        // Predicated region
        $region41: #{tpu_custom_call.1} parent=11 // pred_check
          %p713 = pneg %p264
        $region42: #{tpu_custom_call.1} parent=11 // pred_check_branch
          %715 = sbr.rel (%p713) target = $region44
        $region43: #{tpu_custom_call.1} parent=11 // pred_region
          _
        $region44: #{tpu_custom_call.1} parent=11 // pred_fallthru
          _
        // Predicated region
        $region45: #{tpu_custom_call.1} parent=11 // pred_check
          %p716 = pneg %p285
        $region46: #{tpu_custom_call.1} parent=11 // pred_check_branch
          %718 = sbr.rel (%p716) target = $region48
        $region47: #{tpu_custom_call.1} parent=11 // pred_region
          _
        $region48: #{tpu_custom_call.1} parent=11 // pred_fallthru
          _
        // Predicated region
        $region49: #{tpu_custom_call.1} parent=11 // pred_check
          %p719 = pneg %p306
        $region50: #{tpu_custom_call.1} parent=11 // pred_check_branch
          %721 = sbr.rel (%p719) target = $region52
        $region51: #{tpu_custom_call.1} parent=11 // pred_region
          _
        $region52: #{tpu_custom_call.1} parent=11 // pred_fallthru
          _
        // Predicated region
        $region53: #{tpu_custom_call.1} parent=11 // pred_check
          %p722 = pneg %p327
        $region54: #{tpu_custom_call.1} parent=11 // pred_check_branch
          %724 = sbr.rel (%p722) target = $region56
        $region55: #{tpu_custom_call.1} parent=11 // pred_region
          _
        $region56: #{tpu_custom_call.1} parent=11 // pred_fallthru
          _
        // Predicated region
        $region57: #{tpu_custom_call.1} parent=11 // pred_check
          %p725 = pneg %p348
        $region58: #{tpu_custom_call.1} parent=11 // pred_check_branch
          %727 = sbr.rel (%p725) target = $region60
        $region59: #{tpu_custom_call.1} parent=11 // pred_region
          _
        $region60: #{tpu_custom_call.1} parent=11 // pred_fallthru
          _
        // Predicated region
        $region61: #{tpu_custom_call.1} parent=11 // pred_check
          %p728 = pneg %p369
        $region62: #{tpu_custom_call.1} parent=11 // pred_check_branch
          %730 = sbr.rel (%p728) target = $region64
        $region63: #{tpu_custom_call.1} parent=11 // pred_region
          _
        $region64: #{tpu_custom_call.1} parent=11 // pred_fallthru
          _
        // Predicated region
        $region65: #{tpu_custom_call.1} parent=11 // pred_check
          %p731 = pneg %p390
        $region66: #{tpu_custom_call.1} parent=11 // pred_check_branch
          %733 = sbr.rel (%p731) target = $region68
        $region67: #{tpu_custom_call.1} parent=11 // pred_region
          _
        $region68: #{tpu_custom_call.1} parent=11 // pred_fallthru
          _
        // Predicated region
        $region69: #{tpu_custom_call.1} parent=11 // pred_check
          %p734 = pneg %p411
        $region70: #{tpu_custom_call.1} parent=11 // pred_check_branch
          %736 = sbr.rel (%p734) target = $region72
        $region71: #{tpu_custom_call.1} parent=11 // pred_region
          _
        $region72: #{tpu_custom_call.1} parent=11 // pred_fallthru
          _
        // Predicated region
        $region73: #{tpu_custom_call.1} parent=11 // pred_check
          %p737 = pneg %p432
        $region74: #{tpu_custom_call.1} parent=11 // pred_check_branch
          %739 = sbr.rel (%p737) target = $region76
        $region75: #{tpu_custom_call.1} parent=11 // pred_region
          _
        $region76: #{tpu_custom_call.1} parent=11 // pred_fallthru
          _
        // Predicated region
        $region77: #{tpu_custom_call.1} parent=11 // pred_check
          %p740 = pneg %p453
        $region78: #{tpu_custom_call.1} parent=11 // pred_check_branch
          %742 = sbr.rel (%p740) target = $region80
        $region79: #{tpu_custom_call.1} parent=11 // pred_region
          _
        $region80: #{tpu_custom_call.1} parent=11 // pred_fallthru
          _
        // Predicated region
        $region81: #{tpu_custom_call.1} parent=11 // pred_check
          %p743 = pneg %p474
        $region82: #{tpu_custom_call.1} parent=11 // pred_check_branch
          %745 = sbr.rel (%p743) target = $region84
        $region83: #{tpu_custom_call.1} parent=11 // pred_region
          _
        $region84: #{tpu_custom_call.1} parent=11 // pred_fallthru
          _
        // Predicated region
        $region85: #{tpu_custom_call.1} parent=11 // pred_check
          %p746 = pneg %p495
        $region86: #{tpu_custom_call.1} parent=11 // pred_check_branch
          %748 = sbr.rel (%p746) target = $region88
        $region87: #{tpu_custom_call.1} parent=11 // pred_region
          _
        $region88: #{tpu_custom_call.1} parent=11 // pred_fallthru
          _
        // Predicated region
        $region89: #{tpu_custom_call.1} parent=11 // pred_check
          %p749 = pneg %p516
        $region90: #{tpu_custom_call.1} parent=11 // pred_check_branch
          %751 = sbr.rel (%p749) target = $region92
        $region91: #{tpu_custom_call.1} parent=11 // pred_region
          _
        $region92: #{tpu_custom_call.1} parent=11 // pred_fallthru
          _
        // Predicated region
        $region93: #{tpu_custom_call.1} parent=11 // pred_check
          %p752 = pneg %p537
        $region94: #{tpu_custom_call.1} parent=11 // pred_check_branch
          %754 = sbr.rel (%p752) target = $region96
        $region95: #{tpu_custom_call.1} parent=11 // pred_region
          %756 = vsyncadd [#allocation9], 0
          %s757 = sshll.u32 %s22, 4
          %s758 = int_to_ptr.hbm [resolvable:$true] %s757
          %s759 = sshll.u32 [#allocation8], 4
          %s760 = int_to_ptr.vmem [resolvable:$true] %s759
          %765 = dma.hbm_to_vmem [thread:$0]  %s758, 512, %s760, [#allocation9], 128, 128, 8
        $region96: #{tpu_custom_call.1} parent=11 // pred_fallthru
          _
        // Predicated region
        $region97: #{tpu_custom_call.1} parent=11 // pred_check
          %p766 = pneg %p558
        $region98: #{tpu_custom_call.1} parent=11 // pred_check_branch
          %768 = sbr.rel (%p766) target = $region100
        $region99: #{tpu_custom_call.1} parent=11 // pred_region
          _
        $region100: #{tpu_custom_call.1} parent=11 // pred_fallthru
          _
        // Predicated region
        $region101: #{tpu_custom_call.1} parent=11 // pred_check
          %p769 = pneg %p579
        $region102: #{tpu_custom_call.1} parent=11 // pred_check_branch
          %771 = sbr.rel (%p769) target = $region104
        $region103: #{tpu_custom_call.1} parent=11 // pred_region
          _
        $region104: #{tpu_custom_call.1} parent=11 // pred_fallthru
          _
        // Predicated region
        $region105: #{tpu_custom_call.1} parent=11 // pred_check
          %p772 = pneg %p600
        $region106: #{tpu_custom_call.1} parent=11 // pred_check_branch
          %774 = sbr.rel (%p772) target = $region108
        $region107: #{tpu_custom_call.1} parent=11 // pred_region
          _
        $region108: #{tpu_custom_call.1} parent=11 // pred_fallthru
          _
        // Predicated region
        $region109: #{tpu_custom_call.1} parent=11 // pred_check
          %p775 = pneg %p621
        $region110: #{tpu_custom_call.1} parent=11 // pred_check_branch
          %777 = sbr.rel (%p775) target = $region112
        $region111: #{tpu_custom_call.1} parent=11 // pred_region
          _
        $region112: #{tpu_custom_call.1} parent=11 // pred_fallthru
          _
        // Predicated region
        $region113: #{tpu_custom_call.1} parent=11 // pred_check
          %p778 = pneg %p642
        $region114: #{tpu_custom_call.1} parent=11 // pred_check_branch
          %780 = sbr.rel (%p778) target = $region116
        $region115: #{tpu_custom_call.1} parent=11 // pred_region
          _
        $region116: #{tpu_custom_call.1} parent=11 // pred_fallthru
          _
      $region12: #{tpu_custom_call.1} parent=5 // pred_fallthru
        _
      %p781 = scmp.lt.s32.totalorder %s44, 2
      // Predicated region
      $region117: #{tpu_custom_call.1} parent=5 // pred_check
        %p782 = pneg %p781
      $region118: #{tpu_custom_call.1} parent=5 // pred_check_branch
        %784 = sbr.rel (%p782) target = $region120
      $region119: #{tpu_custom_call.1} parent=5 // pred_region
        // Predicated region
        $region121: #{tpu_custom_call.1} parent=119 // pred_check
          %p785 = pneg %p64
        $region122: #{tpu_custom_call.1} parent=119 // pred_check_branch
          %787 = sbr.rel (%p785) target = $region124
        $region123: #{tpu_custom_call.1} parent=119 // pred_region
          %s788 = sand.u32 %s54, 1
          %s789 = scalar_lea.sflag [#allocation3], %s788
          %s790 = sand.u32 %s54, 1
          %s791 = smul.addr %s790, 8
          %s792 = scalar_lea.vmem [#allocation2], %s791
          %794 = vsyncadd %s789, 0
          %s795 = smul.addr %s44, 8
          %s796 = scalar_lea.hbm %s0, %s795
          %s798 = sshll.u32 %s796, 4
          %s799 = int_to_ptr.hbm [resolvable:$true] %s798
          %s800 = sshll.u32 %s792, 4
          %s801 = int_to_ptr.vmem [resolvable:$true] %s800
          %803 = dma.hbm_to_vmem [thread:$0]  %s799, 128, %s801, %s789
        $region124: #{tpu_custom_call.1} parent=119 // pred_fallthru
          _
        // Predicated region
        $region125: #{tpu_custom_call.1} parent=119 // pred_check
          %p804 = pneg %p90
        $region126: #{tpu_custom_call.1} parent=119 // pred_check_branch
          %806 = sbr.rel (%p804) target = $region128
        $region127: #{tpu_custom_call.1} parent=119 // pred_region
          %s807 = sand.u32 %s44, 1
          %s808 = scalar_lea.sflag [#allocation6], %s807
          %s809 = sand.u32 %s80, 1
          %s810 = scalar_lea.vmem [#allocation5], %s809
          %812 = vsyncadd %s808, 0
          %s813 = scalar_lea.hbm %s1, %s44
          %s815 = sshll.u32 %s813, 4
          %s816 = int_to_ptr.hbm [resolvable:$true] %s815
          %s817 = sshll.u32 %s810, 4
          %s818 = int_to_ptr.vmem [resolvable:$true] %s817
          %820 = dma.hbm_to_vmem [thread:$0]  %s816, 16, %s818, %s808
        $region128: #{tpu_custom_call.1} parent=119 // pred_fallthru
          _
      $region120: #{tpu_custom_call.1} parent=5 // pred_fallthru
        _
      %p821 = scmp.le.s32.totalorder 1, %s44
      %p822 = scmp.lt.s32.totalorder %s44, 3
      %p823 = pnand %p821, %p822
      %p824 = pneg %p823
      // Predicated region
      $region129: #{tpu_custom_call.1} parent=5 // pred_check
        _
      $region130: #{tpu_custom_call.1} parent=5 // pred_check_branch
        %826 = sbr.rel (%p823) target = $region132
      $region131: #{tpu_custom_call.1} parent=5 // pred_region
        %s827 = ssub.s32 %s44, 1
        %s828 = sand.u32 %s57, 1
        %s829 = scalar_lea.sflag [#allocation3], %s828
        %s830 = sand.u32 %s57, 1
        %s831 = smul.addr %s830, 8
        %s832 = scalar_lea.vmem [#allocation2], %s831
        // Predicated region
        $region133: #{tpu_custom_call.1} parent=131 // pred_check
          %p833 = pneg %p70
        $region134: #{tpu_custom_call.1} parent=131 // pred_check_branch
          %835 = sbr.rel (%p833) target = $region136
        $region135: #{tpu_custom_call.1} parent=131 // pred_region
          %837 = dma.done %s829, 128
        $region136: #{tpu_custom_call.1} parent=131 // pred_fallthru
          _
        %s838 = sand.u32 %s49, 1
        %s839 = scalar_lea.sflag [#allocation6], %s838
        %s840 = sand.u32 %s83, 1
        %s841 = scalar_lea.vmem [#allocation5], %s840
        // Predicated region
        $region137: #{tpu_custom_call.1} parent=131 // pred_check
          %p842 = pneg %p96
        $region138: #{tpu_custom_call.1} parent=131 // pred_check_branch
          %844 = sbr.rel (%p842) target = $region140
        $region139: #{tpu_custom_call.1} parent=131 // pred_region
          %846 = dma.done %s839, 16
        $region140: #{tpu_custom_call.1} parent=131 // pred_fallthru
          _
        // Predicated region
        $region141: #{tpu_custom_call.1} parent=131 // pred_check
          %p847 = pneg %p117
        $region142: #{tpu_custom_call.1} parent=131 // pred_check_branch
          %849 = sbr.rel (%p847) target = $region144
        $region143: #{tpu_custom_call.1} parent=131 // pred_region
          %851 = dma.done [#allocation6], 16
        $region144: #{tpu_custom_call.1} parent=131 // pred_fallthru
          _
        // Predicated region
        $region145: #{tpu_custom_call.1} parent=131 // pred_check
          %p852 = pneg %p537
        $region146: #{tpu_custom_call.1} parent=131 // pred_check_branch
          %854 = sbr.rel (%p852) target = $region148
        $region147: #{tpu_custom_call.1} parent=131 // pred_region
          %856 = dma.done [#allocation9], 512
        $region148: #{tpu_custom_call.1} parent=131 // pred_fallthru
          _
        %s857 = sand.u32 %s57, 1
        %s858 = scalar_lea.sflag [#allocation3], %s857
        %s859 = sand.u32 %s57, 1
        %s860 = smul.addr %s859, 8
        %s861 = scalar_lea.vmem [#allocation2], %s860
        %p862 = pneg %p70
        %p863 = pneg %p67
        %s864 = sand.u32 %s49, 1
        %s865 = scalar_lea.sflag [#allocation6], %s864
        %s866 = sand.u32 %s83, 1
        %s867 = scalar_lea.vmem [#allocation5], %s866
        %p868 = pneg %p96
        %p869 = pneg %p93
        %p870 = pneg %p117
        %p871 = pneg %p114
        %p872 = pneg %p138
        %p873 = pneg %p135
        %p874 = pneg %p159
        %p875 = pneg %p156
        %p876 = pneg %p180
        %p877 = pneg %p177
        %p878 = pneg %p201
        %p879 = pneg %p198
        %p880 = pneg %p222
        %p881 = pneg %p219
        %p882 = pneg %p243
        %p883 = pneg %p240
        %p884 = pneg %p264
        %p885 = pneg %p261
        %p886 = pneg %p285
        %p887 = pneg %p282
        %p888 = pneg %p306
        %p889 = pneg %p303
        %p890 = pneg %p327
        %p891 = pneg %p324
        %p892 = pneg %p348
        %p893 = pneg %p345
        %p894 = pneg %p369
        %p895 = pneg %p366
        %p896 = pneg %p390
        %p897 = pneg %p387
        %p898 = pneg %p411
        %p899 = pneg %p408
        %p900 = pneg %p432
        %p901 = pneg %p429
        %p902 = pneg %p453
        %p903 = pneg %p450
        %p904 = pneg %p474
        %p905 = pneg %p471
        %p906 = pneg %p495
        %p907 = pneg %p492
        %p908 = pneg %p516
        %p909 = pneg %p513
        %p910 = pneg %p537
        %p911 = pneg %p534
        %p912 = pneg %p558
        %p913 = pneg %p555
        %p914 = pneg %p579
        %p915 = pneg %p576
        %p916 = pneg %p600
        %p917 = pneg %p597
        %p918 = pneg %p621
        %p919 = pneg %p618
        %p920 = pneg %p642
        %p921 = pneg %p639
        %p922 = pneg %p668
        %p923 = pneg %p665
        %s924 = sand.u32 %s655, 1
        %s925 = scalar_lea.sflag [#allocation4], %s924
        %s926 = sand.u32 %s655, 1
        %s927 = smul.addr %s926, 8
        %s928 = scalar_lea.vmem [#allocation10], %s927
        %v929 = vld [vmem:[%s832] sm:$0xff]
        %v930 = vld [vmem:[#allocation7] sm:$0x1]
        %v931 = vld [vmem:[%s3] sm:$0x1]
        %vm932 = vcmask 261120
        %v933 = vsel %vm932, %v929, 0.0
        %934 = vadd.xlane.f32.xlu0 %v933
        %v935 = vpop.xlane.xlu0 %934
        %v936 = vrcp.pop 32.0
        %v937 = vmul.f32 32.0, %v936
        %v938 = vsub.f32 1.0, %v937
        %v939 = vmul.f32 %v936, %v938
        %v940 = vadd.f32 %v936, %v939
        %vm941 = vweird.f32 %v936
        %v942 = vsel %vm941, %v936, %v940
        %v943 = vmul.f32 %v935, %v942
        %v944 = vsub.f32 %v929, %v943
        %v945 = vmul.f32 %v944, %v944
        %v946 = vsel %vm932, %v945, 0.0
        %947 = vadd.xlane.f32.xlu0 %v946
        %v948 = vpop.xlane.xlu0 %947
        %v949 = vmul.f32 %v948, %v942
        %v950 = vadd.f32 %v949, 1e-12
        %v951 = vrsqrt.pop %v950
        %v952 = vmul.f32 %v951, %v950
        %v953 = vmul.f32 %v952, %v951
        %v954 = vmul.f32 0.5, %v953
        %v955 = vsub.f32 1.5, %v954
        %v956 = vmul.f32 %v951, %v955
        %vm957 = vweird.f32 %v950
        %vm958 = vweird.f32 %v951
        %vm959 = vmor %vm957, %vm958
        %v960 = vsel %vm959, %v951, %v956
        %v961 = vmul.f32 %v944, %v960
        %v963 = vperm.slane %v930, 0
        %v965 = vmul.f32 %v961, %v963
        %v967 = vperm.slane %v931, 0
        %v969 = vadd.f32 %v965, %v967
        %v970 = vld [vmem:[%s841] sm:$0x1]
        %v971 = vld [vmem:[%s4] sm:$0xff]
        %v972 = vld [vmem:[%s4 + $0x8] sm:$0xff]
        %v973 = vld [vmem:[%s4 + $0x10] sm:$0xff]
        %v974 = vld [vmem:[%s4 + $0x18] sm:$0xff]
        %v975 = vld [vmem:[%s5] sm:$0x1]
        %v977 = vperm.slane %v975, 0
        %v980 = vsel %vm932, %v969, 0
        %982 = vmatpush.msra.mxu0 0.0
        %983 = vmatpush.msra.mxu0 0.0
        %984 = vmatpush.msra.mxu0 0.0
        %985 = vmatpush.msra.mxu0 0.0
        %986 = vmatpush.msra.mxu0 0.0
        %987 = vmatpush.msra.mxu0 0.0
        %988 = vmatpush.msra.mxu0 0.0
        %989 = vmatpush.msra.mxu0 0.0
        %990 = vmatpush.msra.mxu0 0.0
        %991 = vmatpush.msra.mxu0 0.0
        %992 = vmatpush.msra.mxu0 0.0
        %993 = vmatpush.msra.mxu0 0.0
        %994 = vmatpush.msra.mxu0 %v974
        %995 = vmatpush.msra.mxu0 %v973
        %996 = vmatpush.msra.mxu0 %v972
        %997 = vmatpush.msra.mxu0 %v971
        %998 = vmatmul.f32.gmra.mxu0 %v980
        %v999 = vpop.f32.mrf.mxu0
        %v1000 = vadd.f32 %v977, %v999
        %1001 = vdwg.mxu0
        %1003 = vrot.lane.b32.xlu0 %v1000, 96
        %v1004 = vpop.permute.xlu0 %1003
        %vm1005 = vcmask 130048
        %v1006 = vsel %vm1005, %v1000, 0
        %v1008 = vsel %vm1005, %v1004, 0
        %1010 = vmatpush.xpose.msra.mxu0 0.0
        %1011 = vmatpush.xpose.msra.mxu0 0.0
        %1012 = vmatpush.xpose.msra.mxu0 0.0
        %1013 = vmatpush.xpose.msra.mxu0 0.0
        %1014 = vmatpush.xpose.msra.mxu0 0.0
        %1015 = vmatpush.xpose.msra.mxu0 0.0
        %1016 = vmatpush.xpose.msra.mxu0 0.0
        %1017 = vmatpush.xpose.msra.mxu0 0.0
        %1018 = vmatpush.xpose.msra.mxu0 0.0
        %1019 = vmatpush.xpose.msra.mxu0 0.0
        %1020 = vmatpush.xpose.msra.mxu0 0.0
        %1021 = vmatpush.xpose.msra.mxu0 0.0
        %1022 = vmatpush.xpose.msra.mxu0 0.0
        %1023 = vmatpush.xpose.msra.mxu0 0.0
        %1024 = vmatpush.xpose.msra.mxu0 0.0
        %1025 = vmatpush.xpose.msra.mxu0 %v1008
        %1026 = vmatmul.f32.gmra.mxu0 %v1006
        %v1027 = vpop.f32.mrf.mxu0
        %v1028 = vadd.f32 0.0, %v1027
        %1029 = vdwg.mxu0
        %v1030 = vmul.f32 %v1028, 0.25
        %v1032 = vperm.slane %v970, 0
        %v1034 = vadd.f32 %v1030, %v1032
        %vm1035 = vcmask 64512
        %v1036 = vsel %vm1035, %v1034, -inf
        %1037 = vmax.xlane.f32.xlu0 %v1036
        %v1038 = vpop.xlane.xlu0 %1037
        %v1039 = vsub.f32 %v1034, %v1038
        %v1040 = vmul.f32 %v1039, 1.442695
        %v1041 = vpow.pop %v1040
        %v1042 = vsel %vm1035, %v1041, 0.0
        %1043 = vadd.xlane.f32.xlu0 %v1042
        %v1044 = vpop.xlane.xlu0 %1043
        %v1045 = vrcp.pop %v1044
        %v1046 = vmul.f32 %v1044, %v1045
        %v1047 = vsub.f32 1.0, %v1046
        %v1048 = vmul.f32 %v1045, %v1047
        %v1049 = vadd.f32 %v1045, %v1048
        %vm1050 = vweird.f32 %v1044
        %vm1051 = vweird.f32 %v1045
        %vm1052 = vmor %vm1050, %vm1051
        %v1053 = vsel %vm1052, %v1045, %v1049
        %v1054 = vand.u32 2147483647, %v1044
        %vm1055 = vcmp.eq.f32.partialorder %v1054, 8.507059e+37
        %v1056 = vand.u32 %v1044, 2147483648
        %v1057 = vor.u32 1.1754944e-38, %v1056
        %v1058 = vsel %vm1055, %v1057, %v1053
        %v1059 = vmul.f32 %v1041, %v1058
        %1060 = vrot.lane.b32.xlu0 %v1000, 64
        %v1061 = vpop.permute.xlu0 %1060
        %v1064 = vsel %vm1035, %v1059, 0
        %1066 = vmatpush.msra.mxu0 0.0
        %1067 = vmatpush.msra.mxu0 0.0
        %1068 = vmatpush.msra.mxu0 0.0
        %1069 = vmatpush.msra.mxu0 0.0
        %1070 = vmatpush.msra.mxu0 0.0
        %1071 = vmatpush.msra.mxu0 0.0
        %1072 = vmatpush.msra.mxu0 0.0
        %1073 = vmatpush.msra.mxu0 0.0
        %1074 = vmatpush.msra.mxu0 0.0
        %1075 = vmatpush.msra.mxu0 0.0
        %1076 = vmatpush.msra.mxu0 0.0
        %1077 = vmatpush.msra.mxu0 0.0
        %1078 = vmatpush.msra.mxu0 0.0
        %1079 = vmatpush.msra.mxu0 0.0
        %1080 = vmatpush.msra.mxu0 0.0
        %1081 = vmatpush.msra.mxu0 %v1061
        %1082 = vmatmul.f32.gmra.mxu0 %v1064
        %v1083 = vpop.f32.mrf.mxu0
        %v1084 = vadd.f32 0.0, %v1083
        %1085 = vdwg.mxu0
        %1086 = vrot.lane.b32.xlu0 %v1000, 112
        %v1087 = vpop.permute.xlu0 %1086
        %1088 = vrot.lane.b32.xlu0 %v1000, 80
        %v1089 = vpop.permute.xlu0 %1088
        %v1090 = vsel %vm1005, %v1087, 0
        %v1092 = vsel %vm1005, %v1089, 0
        %1094 = vmatpush.xpose.msra.mxu0 0.0
        %1095 = vmatpush.xpose.msra.mxu0 0.0
        %1096 = vmatpush.xpose.msra.mxu0 0.0
        %1097 = vmatpush.xpose.msra.mxu0 0.0
        %1098 = vmatpush.xpose.msra.mxu0 0.0
        %1099 = vmatpush.xpose.msra.mxu0 0.0
        %1100 = vmatpush.xpose.msra.mxu0 0.0
        %1101 = vmatpush.xpose.msra.mxu0 0.0
        %1102 = vmatpush.xpose.msra.mxu0 0.0
        %1103 = vmatpush.xpose.msra.mxu0 0.0
        %1104 = vmatpush.xpose.msra.mxu0 0.0
        %1105 = vmatpush.xpose.msra.mxu0 0.0
        %1106 = vmatpush.xpose.msra.mxu0 0.0
        %1107 = vmatpush.xpose.msra.mxu0 0.0
        %1108 = vmatpush.xpose.msra.mxu0 0.0
        %1109 = vmatpush.xpose.msra.mxu0 %v1092
        %1110 = vmatmul.f32.gmra.mxu0 %v1090
        %v1111 = vpop.f32.mrf.mxu0
        %v1112 = vadd.f32 0.0, %v1111
        %1113 = vdwg.mxu0
        %v1114 = vmul.f32 %v1112, 0.25
        %v1115 = vadd.f32 %v1114, %v1032
        %v1116 = vsel %vm1035, %v1115, -inf
        %1117 = vmax.xlane.f32.xlu0 %v1116
        %v1118 = vpop.xlane.xlu0 %1117
        %v1119 = vsub.f32 %v1115, %v1118
        %v1120 = vmul.f32 %v1119, 1.442695
        %v1121 = vpow.pop %v1120
        %v1122 = vsel %vm1035, %v1121, 0.0
        %1123 = vadd.xlane.f32.xlu0 %v1122
        %v1124 = vpop.xlane.xlu0 %1123
        %v1125 = vrcp.pop %v1124
        %v1126 = vmul.f32 %v1124, %v1125
        %v1127 = vsub.f32 1.0, %v1126
        %v1128 = vmul.f32 %v1125, %v1127
        %v1129 = vadd.f32 %v1125, %v1128
        %vm1130 = vweird.f32 %v1124
        %vm1131 = vweird.f32 %v1125
        %vm1132 = vmor %vm1130, %vm1131
        %v1133 = vsel %vm1132, %v1125, %v1129
        %v1134 = vand.u32 2147483647, %v1124
        %vm1135 = vcmp.eq.f32.partialorder %v1134, 8.507059e+37
        %v1136 = vand.u32 %v1124, 2147483648
        %v1137 = vor.u32 1.1754944e-38, %v1136
        %v1138 = vsel %vm1135, %v1137, %v1133
        %v1139 = vmul.f32 %v1121, %v1138
        %1140 = vrot.lane.b32.xlu0 %v1000, 48
        %v1141 = vpop.permute.xlu0 %1140
        %v1144 = vsel %vm1035, %v1139, 0
        %1146 = vmatpush.msra.mxu0 0.0
        %1147 = vmatpush.msra.mxu0 0.0
        %1148 = vmatpush.msra.mxu0 0.0
        %1149 = vmatpush.msra.mxu0 0.0
        %1150 = vmatpush.msra.mxu0 0.0
        %1151 = vmatpush.msra.mxu0 0.0
        %1152 = vmatpush.msra.mxu0 0.0
        %1153 = vmatpush.msra.mxu0 0.0
        %1154 = vmatpush.msra.mxu0 0.0
        %1155 = vmatpush.msra.mxu0 0.0
        %1156 = vmatpush.msra.mxu0 0.0
        %1157 = vmatpush.msra.mxu0 0.0
        %1158 = vmatpush.msra.mxu0 0.0
        %1159 = vmatpush.msra.mxu0 0.0
        %1160 = vmatpush.msra.mxu0 0.0
        %1161 = vmatpush.msra.mxu0 %v1141
        %1162 = vmatmul.f32.gmra.mxu0 %v1144
        %v1163 = vpop.f32.mrf.mxu0
        %v1164 = vadd.f32 0.0, %v1163
        %1165 = vdwg.mxu0
        %1167 = vrot.lane.b32.xlu0 %v1164, 16
        %v1168 = vpop.permute.xlu0 %1167
        %v1170 = vsel %vm1005, %v1084, %v1168
        %v1171 = vld [vmem:[%s6] sm:$0xff]
        %v1172 = vld [vmem:[%s6 + $0x8] sm:$0xff]
        %v1173 = vld [vmem:[%s6 + $0x10] sm:$0xff]
        %v1174 = vld [vmem:[%s6 + $0x18] sm:$0xff]
        %v1175 = vld [vmem:[%s7] sm:$0x1]
        %v1177 = vperm.slane %v1175, 0
        %v1180 = vsel %vm932, %v1170, 0
        %1182 = vmatpush.msra.mxu0 0.0
        %1183 = vmatpush.msra.mxu0 0.0
        %1184 = vmatpush.msra.mxu0 0.0
        %1185 = vmatpush.msra.mxu0 0.0
        %1186 = vmatpush.msra.mxu0 0.0
        %1187 = vmatpush.msra.mxu0 0.0
        %1188 = vmatpush.msra.mxu0 0.0
        %1189 = vmatpush.msra.mxu0 0.0
        %1190 = vmatpush.msra.mxu0 0.0
        %1191 = vmatpush.msra.mxu0 0.0
        %1192 = vmatpush.msra.mxu0 0.0
        %1193 = vmatpush.msra.mxu0 0.0
        %1194 = vmatpush.msra.mxu0 %v1174
        %1195 = vmatpush.msra.mxu0 %v1173
        %1196 = vmatpush.msra.mxu0 %v1172
        %1197 = vmatpush.msra.mxu0 %v1171
        %1198 = vmatmul.f32.gmra.mxu0 %v1180
        %v1199 = vpop.f32.mrf.mxu0
        %v1200 = vadd.f32 %v1177, %v1199
        %1201 = vdwg.mxu0
        %v1202 = vadd.f32 %v1200, %v969
        %v1203 = vld [vmem:[%s8] sm:$0x1]
        %v1204 = vld [vmem:[%s9] sm:$0x1]
        %v1205 = vsel %vm932, %v1202, 0.0
        %1206 = vadd.xlane.f32.xlu0 %v1205
        %v1207 = vpop.xlane.xlu0 %1206
        %v1208 = vmul.f32 %v1207, %v942
        %v1209 = vsub.f32 %v1202, %v1208
        %v1210 = vmul.f32 %v1209, %v1209
        %v1211 = vsel %vm932, %v1210, 0.0
        %1212 = vadd.xlane.f32.xlu0 %v1211
        %v1213 = vpop.xlane.xlu0 %1212
        %v1214 = vmul.f32 %v1213, %v942
        %v1215 = vadd.f32 %v1214, 1e-12
        %v1216 = vrsqrt.pop %v1215
        %v1217 = vmul.f32 %v1216, %v1215
        %v1218 = vmul.f32 %v1217, %v1216
        %v1219 = vmul.f32 0.5, %v1218
        %v1220 = vsub.f32 1.5, %v1219
        %v1221 = vmul.f32 %v1216, %v1220
        %vm1222 = vweird.f32 %v1215
        %vm1223 = vweird.f32 %v1216
        %vm1224 = vmor %vm1222, %vm1223
        %v1225 = vsel %vm1224, %v1216, %v1221
        %v1226 = vmul.f32 %v1209, %v1225
        %v1228 = vperm.slane %v1203, 0
        %v1230 = vmul.f32 %v1226, %v1228
        %v1232 = vperm.slane %v1204, 0
        %v1234 = vadd.f32 %v1230, %v1232
        %v1235 = vld [vmem:[%s10] sm:$0xff]
        %v1236 = vld [vmem:[%s10 + $0x8] sm:$0xff]
        %v1237 = vld [vmem:[%s10 + $0x10] sm:$0xff]
        %v1238 = vld [vmem:[%s10 + $0x18] sm:$0xff]
        %v1239 = vld [vmem:[%s11] sm:$0x1]
        %v1241 = vperm.slane %v1239, 0
        %v1244 = vsel %vm932, %v1234, 0
        %1246 = vmatpush.msra.mxu0 0.0
        %1247 = vmatpush.msra.mxu0 0.0
        %1248 = vmatpush.msra.mxu0 0.0
        %1249 = vmatpush.msra.mxu0 0.0
        %1250 = vmatpush.msra.mxu0 0.0
        %1251 = vmatpush.msra.mxu0 0.0
        %1252 = vmatpush.msra.mxu0 0.0
        %1253 = vmatpush.msra.mxu0 0.0
        %1254 = vmatpush.msra.mxu0 0.0
        %1255 = vmatpush.msra.mxu0 0.0
        %1256 = vmatpush.msra.mxu0 0.0
        %1257 = vmatpush.msra.mxu0 0.0
        %1258 = vmatpush.msra.mxu0 %v1238
        %1259 = vmatpush.msra.mxu0 %v1237
        %1260 = vmatpush.msra.mxu0 %v1236
        %1261 = vmatpush.msra.mxu0 %v1235
        %1262 = vmatmul.f32.gmra.mxu0 %v1244
        %v1263 = vpop.f32.mrf.mxu0
        %v1264 = vadd.f32 %v1241, %v1263
        %1265 = vdwg.mxu0
        %v1266 = vmul.f32 %v1264, 0.5
        %v1267 = vmul.f32 %v1264, 0.044715
        %v1268 = vmul.f32 %v1267, %v1264
        %v1269 = vmul.f32 %v1268, %v1264
        %v1270 = vadd.f32 %v1264, %v1269
        %v1271 = vmul.f32 %v1270, 0.7978846
        %v1272 = vtanh.pop %v1271
        %v1273 = vadd.f32 %v1272, 1.0
        %v1274 = vmul.f32 %v1266, %v1273
        %v1275 = vld [vmem:[%s12] sm:$0xff]
        %v1276 = vld [vmem:[%s12 + $0x8] sm:$0xff]
        %v1277 = vld [vmem:[%s12 + $0x10] sm:$0xff]
        %v1278 = vld [vmem:[%s12 + $0x18] sm:$0xff]
        %v1279 = vld [vmem:[%s12 + $0x20] sm:$0xff]
        %v1280 = vld [vmem:[%s12 + $0x28] sm:$0xff]
        %v1281 = vld [vmem:[%s12 + $0x30] sm:$0xff]
        %v1282 = vld [vmem:[%s12 + $0x38] sm:$0xff]
        %v1283 = vld [vmem:[%s13] sm:$0x1]
        %v1285 = vperm.slane %v1283, 0
        %vm1287 = vcmask 523264
        %v1289 = vsel %vm1287, %v1274, 0
        %1291 = vmatpush.msra.mxu0 0.0
        %1292 = vmatpush.msra.mxu0 0.0
        %1293 = vmatpush.msra.mxu0 0.0
        %1294 = vmatpush.msra.mxu0 0.0
        %1295 = vmatpush.msra.mxu0 0.0
        %1296 = vmatpush.msra.mxu0 0.0
        %1297 = vmatpush.msra.mxu0 0.0
        %1298 = vmatpush.msra.mxu0 0.0
        %1299 = vmatpush.msra.mxu0 %v1282
        %1300 = vmatpush.msra.mxu0 %v1281
        %1301 = vmatpush.msra.mxu0 %v1280
        %1302 = vmatpush.msra.mxu0 %v1279
        %1303 = vmatpush.msra.mxu0 %v1278
        %1304 = vmatpush.msra.mxu0 %v1277
        %1305 = vmatpush.msra.mxu0 %v1276
        %1306 = vmatpush.msra.mxu0 %v1275
        %1307 = vmatmul.f32.gmra.mxu0 %v1289
        %v1308 = vpop.f32.mrf.mxu0
        %v1309 = vadd.f32 %v1285, %v1308
        %1310 = vdwg.mxu0
        %v1311 = vadd.f32 %v1309, %v1234
        %v1312 = vld [vmem:[%s14] sm:$0x1]
        %v1313 = vld [vmem:[%s15] sm:$0x1]
        %v1314 = vsel %vm932, %v1311, 0.0
        %1315 = vadd.xlane.f32.xlu0 %v1314
        %v1316 = vpop.xlane.xlu0 %1315
        %v1317 = vmul.f32 %v1316, %v942
        %v1318 = vsub.f32 %v1311, %v1317
        %v1319 = vmul.f32 %v1318, %v1318
        %v1320 = vsel %vm932, %v1319, 0.0
        %1321 = vadd.xlane.f32.xlu0 %v1320
        %v1322 = vpop.xlane.xlu0 %1321
        %v1323 = vmul.f32 %v1322, %v942
        %v1324 = vadd.f32 %v1323, 1e-12
        %v1325 = vrsqrt.pop %v1324
        %v1326 = vmul.f32 %v1325, %v1324
        %v1327 = vmul.f32 %v1326, %v1325
        %v1328 = vmul.f32 0.5, %v1327
        %v1329 = vsub.f32 1.5, %v1328
        %v1330 = vmul.f32 %v1325, %v1329
        %vm1331 = vweird.f32 %v1324
        %vm1332 = vweird.f32 %v1325
        %vm1333 = vmor %vm1331, %vm1332
        %v1334 = vsel %vm1333, %v1325, %v1330
        %v1335 = vmul.f32 %v1318, %v1334
        %v1337 = vperm.slane %v1312, 0
        %v1339 = vmul.f32 %v1335, %v1337
        %v1341 = vperm.slane %v1313, 0
        %v1343 = vadd.f32 %v1339, %v1341
        %v1344 = vld [vmem:[%s16] sm:$0xff]
        %v1345 = vld [vmem:[%s16 + $0x8] sm:$0xff]
        %v1346 = vld [vmem:[%s16 + $0x10] sm:$0xff]
        %v1347 = vld [vmem:[%s16 + $0x18] sm:$0xff]
        %v1348 = vld [vmem:[%s17] sm:$0x1]
        %v1350 = vperm.slane %v1348, 0
        %v1353 = vsel %vm932, %v1343, 0
        %1355 = vmatpush.msra.mxu0 0.0
        %1356 = vmatpush.msra.mxu0 0.0
        %1357 = vmatpush.msra.mxu0 0.0
        %1358 = vmatpush.msra.mxu0 0.0
        %1359 = vmatpush.msra.mxu0 0.0
        %1360 = vmatpush.msra.mxu0 0.0
        %1361 = vmatpush.msra.mxu0 0.0
        %1362 = vmatpush.msra.mxu0 0.0
        %1363 = vmatpush.msra.mxu0 0.0
        %1364 = vmatpush.msra.mxu0 0.0
        %1365 = vmatpush.msra.mxu0 0.0
        %1366 = vmatpush.msra.mxu0 0.0
        %1367 = vmatpush.msra.mxu0 %v1347
        %1368 = vmatpush.msra.mxu0 %v1346
        %1369 = vmatpush.msra.mxu0 %v1345
        %1370 = vmatpush.msra.mxu0 %v1344
        %1371 = vmatmul.f32.gmra.mxu0 %v1353
        %v1372 = vpop.f32.mrf.mxu0
        %v1373 = vadd.f32 %v1350, %v1372
        %1374 = vdwg.mxu0
        %1376 = vrot.lane.b32.xlu0 %v1373, 96
        %v1377 = vpop.permute.xlu0 %1376
        %v1378 = vsel %vm1005, %v1373, 0
        %v1380 = vsel %vm1005, %v1377, 0
        %1382 = vmatpush.xpose.msra.mxu0 0.0
        %1383 = vmatpush.xpose.msra.mxu0 0.0
        %1384 = vmatpush.xpose.msra.mxu0 0.0
        %1385 = vmatpush.xpose.msra.mxu0 0.0
        %1386 = vmatpush.xpose.msra.mxu0 0.0
        %1387 = vmatpush.xpose.msra.mxu0 0.0
        %1388 = vmatpush.xpose.msra.mxu0 0.0
        %1389 = vmatpush.xpose.msra.mxu0 0.0
        %1390 = vmatpush.xpose.msra.mxu0 0.0
        %1391 = vmatpush.xpose.msra.mxu0 0.0
        %1392 = vmatpush.xpose.msra.mxu0 0.0
        %1393 = vmatpush.xpose.msra.mxu0 0.0
        %1394 = vmatpush.xpose.msra.mxu0 0.0
        %1395 = vmatpush.xpose.msra.mxu0 0.0
        %1396 = vmatpush.xpose.msra.mxu0 0.0
        %1397 = vmatpush.xpose.msra.mxu0 %v1380
        %1398 = vmatmul.f32.gmra.mxu0 %v1378
        %v1399 = vpop.f32.mrf.mxu0
        %v1400 = vadd.f32 0.0, %v1399
        %1401 = vdwg.mxu0
        %v1402 = vmul.f32 %v1400, 0.25
        %v1403 = vadd.f32 %v1402, %v1032
        %v1404 = vsel %vm1035, %v1403, -inf
        %1405 = vmax.xlane.f32.xlu0 %v1404
        %v1406 = vpop.xlane.xlu0 %1405
        %v1407 = vsub.f32 %v1403, %v1406
        %v1408 = vmul.f32 %v1407, 1.442695
        %v1409 = vpow.pop %v1408
        %v1410 = vsel %vm1035, %v1409, 0.0
        %1411 = vadd.xlane.f32.xlu0 %v1410
        %v1412 = vpop.xlane.xlu0 %1411
        %v1413 = vrcp.pop %v1412
        %v1414 = vmul.f32 %v1412, %v1413
        %v1415 = vsub.f32 1.0, %v1414
        %v1416 = vmul.f32 %v1413, %v1415
        %v1417 = vadd.f32 %v1413, %v1416
        %vm1418 = vweird.f32 %v1412
        %vm1419 = vweird.f32 %v1413
        %vm1420 = vmor %vm1418, %vm1419
        %v1421 = vsel %vm1420, %v1413, %v1417
        %v1422 = vand.u32 2147483647, %v1412
        %vm1423 = vcmp.eq.f32.partialorder %v1422, 8.507059e+37
        %v1424 = vand.u32 %v1412, 2147483648
        %v1425 = vor.u32 1.1754944e-38, %v1424
        %v1426 = vsel %vm1423, %v1425, %v1421
        %v1427 = vmul.f32 %v1409, %v1426
        %1428 = vrot.lane.b32.xlu0 %v1373, 64
        %v1429 = vpop.permute.xlu0 %1428
        %v1432 = vsel %vm1035, %v1427, 0
        %1434 = vmatpush.msra.mxu0 0.0
        %1435 = vmatpush.msra.mxu0 0.0
        %1436 = vmatpush.msra.mxu0 0.0
        %1437 = vmatpush.msra.mxu0 0.0
        %1438 = vmatpush.msra.mxu0 0.0
        %1439 = vmatpush.msra.mxu0 0.0
        %1440 = vmatpush.msra.mxu0 0.0
        %1441 = vmatpush.msra.mxu0 0.0
        %1442 = vmatpush.msra.mxu0 0.0
        %1443 = vmatpush.msra.mxu0 0.0
        %1444 = vmatpush.msra.mxu0 0.0
        %1445 = vmatpush.msra.mxu0 0.0
        %1446 = vmatpush.msra.mxu0 0.0
        %1447 = vmatpush.msra.mxu0 0.0
        %1448 = vmatpush.msra.mxu0 0.0
        %1449 = vmatpush.msra.mxu0 %v1429
        %1450 = vmatmul.f32.gmra.mxu0 %v1432
        %v1451 = vpop.f32.mrf.mxu0
        %v1452 = vadd.f32 0.0, %v1451
        %1453 = vdwg.mxu0
        %1454 = vrot.lane.b32.xlu0 %v1373, 112
        %v1455 = vpop.permute.xlu0 %1454
        %1456 = vrot.lane.b32.xlu0 %v1373, 80
        %v1457 = vpop.permute.xlu0 %1456
        %v1458 = vsel %vm1005, %v1455, 0
        %v1460 = vsel %vm1005, %v1457, 0
        %1462 = vmatpush.xpose.msra.mxu0 0.0
        %1463 = vmatpush.xpose.msra.mxu0 0.0
        %1464 = vmatpush.xpose.msra.mxu0 0.0
        %1465 = vmatpush.xpose.msra.mxu0 0.0
        %1466 = vmatpush.xpose.msra.mxu0 0.0
        %1467 = vmatpush.xpose.msra.mxu0 0.0
        %1468 = vmatpush.xpose.msra.mxu0 0.0
        %1469 = vmatpush.xpose.msra.mxu0 0.0
        %1470 = vmatpush.xpose.msra.mxu0 0.0
        %1471 = vmatpush.xpose.msra.mxu0 0.0
        %1472 = vmatpush.xpose.msra.mxu0 0.0
        %1473 = vmatpush.xpose.msra.mxu0 0.0
        %1474 = vmatpush.xpose.msra.mxu0 0.0
        %1475 = vmatpush.xpose.msra.mxu0 0.0
        %1476 = vmatpush.xpose.msra.mxu0 0.0
        %1477 = vmatpush.xpose.msra.mxu0 %v1460
        %1478 = vmatmul.f32.gmra.mxu0 %v1458
        %v1479 = vpop.f32.mrf.mxu0
        %v1480 = vadd.f32 0.0, %v1479
        %1481 = vdwg.mxu0
        %v1482 = vmul.f32 %v1480, 0.25
        %v1483 = vadd.f32 %v1482, %v1032
        %v1484 = vsel %vm1035, %v1483, -inf
        %1485 = vmax.xlane.f32.xlu0 %v1484
        %v1486 = vpop.xlane.xlu0 %1485
        %v1487 = vsub.f32 %v1483, %v1486
        %v1488 = vmul.f32 %v1487, 1.442695
        %v1489 = vpow.pop %v1488
        %v1490 = vsel %vm1035, %v1489, 0.0
        %1491 = vadd.xlane.f32.xlu0 %v1490
        %v1492 = vpop.xlane.xlu0 %1491
        %v1493 = vrcp.pop %v1492
        %v1494 = vmul.f32 %v1492, %v1493
        %v1495 = vsub.f32 1.0, %v1494
        %v1496 = vmul.f32 %v1493, %v1495
        %v1497 = vadd.f32 %v1493, %v1496
        %vm1498 = vweird.f32 %v1492
        %vm1499 = vweird.f32 %v1493
        %vm1500 = vmor %vm1498, %vm1499
        %v1501 = vsel %vm1500, %v1493, %v1497
        %v1502 = vand.u32 2147483647, %v1492
        %vm1503 = vcmp.eq.f32.partialorder %v1502, 8.507059e+37
        %v1504 = vand.u32 %v1492, 2147483648
        %v1505 = vor.u32 1.1754944e-38, %v1504
        %v1506 = vsel %vm1503, %v1505, %v1501
        %v1507 = vmul.f32 %v1489, %v1506
        %1508 = vrot.lane.b32.xlu0 %v1373, 48
        %v1509 = vpop.permute.xlu0 %1508
        %v1512 = vsel %vm1035, %v1507, 0
        %1514 = vmatpush.msra.mxu0 0.0
        %1515 = vmatpush.msra.mxu0 0.0
        %1516 = vmatpush.msra.mxu0 0.0
        %1517 = vmatpush.msra.mxu0 0.0
        %1518 = vmatpush.msra.mxu0 0.0
        %1519 = vmatpush.msra.mxu0 0.0
        %1520 = vmatpush.msra.mxu0 0.0
        %1521 = vmatpush.msra.mxu0 0.0
        %1522 = vmatpush.msra.mxu0 0.0
        %1523 = vmatpush.msra.mxu0 0.0
        %1524 = vmatpush.msra.mxu0 0.0
        %1525 = vmatpush.msra.mxu0 0.0
        %1526 = vmatpush.msra.mxu0 0.0
        %1527 = vmatpush.msra.mxu0 0.0
        %1528 = vmatpush.msra.mxu0 0.0
        %1529 = vmatpush.msra.mxu0 %v1509
        %1530 = vmatmul.f32.gmra.mxu0 %v1512
        %v1531 = vpop.f32.mrf.mxu0
        %v1532 = vadd.f32 0.0, %v1531
        %1533 = vdwg.mxu0
        %1535 = vrot.lane.b32.xlu0 %v1532, 16
        %v1536 = vpop.permute.xlu0 %1535
        %v1538 = vsel %vm1005, %v1452, %v1536
        %v1539 = vld [vmem:[%s18] sm:$0xff]
        %v1540 = vld [vmem:[%s18 + $0x8] sm:$0xff]
        %v1541 = vld [vmem:[%s18 + $0x10] sm:$0xff]
        %v1542 = vld [vmem:[%s18 + $0x18] sm:$0xff]
        %v1543 = vld [vmem:[%s19] sm:$0x1]
        %v1545 = vperm.slane %v1543, 0
        %v1548 = vsel %vm932, %v1538, 0
        %1550 = vmatpush.msra.mxu0 0.0
        %1551 = vmatpush.msra.mxu0 0.0
        %1552 = vmatpush.msra.mxu0 0.0
        %1553 = vmatpush.msra.mxu0 0.0
        %1554 = vmatpush.msra.mxu0 0.0
        %1555 = vmatpush.msra.mxu0 0.0
        %1556 = vmatpush.msra.mxu0 0.0
        %1557 = vmatpush.msra.mxu0 0.0
        %1558 = vmatpush.msra.mxu0 0.0
        %1559 = vmatpush.msra.mxu0 0.0
        %1560 = vmatpush.msra.mxu0 0.0
        %1561 = vmatpush.msra.mxu0 0.0
        %1562 = vmatpush.msra.mxu0 %v1542
        %1563 = vmatpush.msra.mxu0 %v1541
        %1564 = vmatpush.msra.mxu0 %v1540
        %1565 = vmatpush.msra.mxu0 %v1539
        %1566 = vmatmul.f32.gmra.mxu0 %v1548
        %v1567 = vpop.f32.mrf.mxu0
        %v1568 = vadd.f32 %v1545, %v1567
        %1569 = vdwg.mxu0
        %v1570 = vadd.f32 %v1568, %v1343
        %v1571 = vld [vmem:[%s20] sm:$0x1]
        %v1572 = vld [vmem:[%s21] sm:$0x1]
        %v1573 = vsel %vm932, %v1570, 0.0
        %1574 = vadd.xlane.f32.xlu0 %v1573
        %v1575 = vpop.xlane.xlu0 %1574
        %v1576 = vmul.f32 %v1575, %v942
        %v1577 = vsub.f32 %v1570, %v1576
        %v1578 = vmul.f32 %v1577, %v1577
        %v1579 = vsel %vm932, %v1578, 0.0
        %1580 = vadd.xlane.f32.xlu0 %v1579
        %v1581 = vpop.xlane.xlu0 %1580
        %v1582 = vmul.f32 %v1581, %v942
        %v1583 = vadd.f32 %v1582, 1e-12
        %v1584 = vrsqrt.pop %v1583
        %v1585 = vmul.f32 %v1584, %v1583
        %v1586 = vmul.f32 %v1585, %v1584
        %v1587 = vmul.f32 0.5, %v1586
        %v1588 = vsub.f32 1.5, %v1587
        %v1589 = vmul.f32 %v1584, %v1588
        %vm1590 = vweird.f32 %v1583
        %vm1591 = vweird.f32 %v1584
        %vm1592 = vmor %vm1590, %vm1591
        %v1593 = vsel %vm1592, %v1584, %v1589
        %v1594 = vmul.f32 %v1577, %v1593
        %v1596 = vperm.slane %v1571, 0
        %v1598 = vmul.f32 %v1594, %v1596
        %v1600 = vperm.slane %v1572, 0
        %v1602 = vadd.f32 %v1598, %v1600
        %v1603 = vld [vmem:[#allocation8] sm:$0xff]
        %v1604 = vld [vmem:[#allocation8 + $0x8] sm:$0xff]
        %v1605 = vld [vmem:[#allocation8 + $0x10] sm:$0xff]
        %v1606 = vld [vmem:[#allocation8 + $0x18] sm:$0xff]
        %v1607 = vld [vmem:[%s23] sm:$0x1]
        %v1609 = vperm.slane %v1607, 0
        %v1612 = vsel %vm932, %v1602, 0
        %1614 = vmatpush.msra.mxu0 0.0
        %1615 = vmatpush.msra.mxu0 0.0
        %1616 = vmatpush.msra.mxu0 0.0
        %1617 = vmatpush.msra.mxu0 0.0
        %1618 = vmatpush.msra.mxu0 0.0
        %1619 = vmatpush.msra.mxu0 0.0
        %1620 = vmatpush.msra.mxu0 0.0
        %1621 = vmatpush.msra.mxu0 0.0
        %1622 = vmatpush.msra.mxu0 0.0
        %1623 = vmatpush.msra.mxu0 0.0
        %1624 = vmatpush.msra.mxu0 0.0
        %1625 = vmatpush.msra.mxu0 0.0
        %1626 = vmatpush.msra.mxu0 %v1606
        %1627 = vmatpush.msra.mxu0 %v1605
        %1628 = vmatpush.msra.mxu0 %v1604
        %1629 = vmatpush.msra.mxu0 %v1603
        %1630 = vmatmul.f32.gmra.mxu0 %v1612
        %v1631 = vpop.f32.mrf.mxu0
        %v1632 = vadd.f32 %v1609, %v1631
        %1633 = vdwg.mxu0
        %v1634 = vmul.f32 %v1632, 0.5
        %v1635 = vmul.f32 %v1632, 0.044715
        %v1636 = vmul.f32 %v1635, %v1632
        %v1637 = vmul.f32 %v1636, %v1632
        %v1638 = vadd.f32 %v1632, %v1637
        %v1639 = vmul.f32 %v1638, 0.7978846
        %v1640 = vtanh.pop %v1639
        %v1641 = vadd.f32 %v1640, 1.0
        %v1642 = vmul.f32 %v1634, %v1641
        %v1643 = vld [vmem:[%s24] sm:$0xff]
        %v1644 = vld [vmem:[%s24 + $0x8] sm:$0xff]
        %v1645 = vld [vmem:[%s24 + $0x10] sm:$0xff]
        %v1646 = vld [vmem:[%s24 + $0x18] sm:$0xff]
        %v1647 = vld [vmem:[%s24 + $0x20] sm:$0xff]
        %v1648 = vld [vmem:[%s24 + $0x28] sm:$0xff]
        %v1649 = vld [vmem:[%s24 + $0x30] sm:$0xff]
        %v1650 = vld [vmem:[%s24 + $0x38] sm:$0xff]
        %v1651 = vld [vmem:[%s25] sm:$0x1]
        %v1653 = vperm.slane %v1651, 0
        %v1656 = vsel %vm1287, %v1642, 0
        %1658 = vmatpush.msra.mxu0 0.0
        %1659 = vmatpush.msra.mxu0 0.0
        %1660 = vmatpush.msra.mxu0 0.0
        %1661 = vmatpush.msra.mxu0 0.0
        %1662 = vmatpush.msra.mxu0 0.0
        %1663 = vmatpush.msra.mxu0 0.0
        %1664 = vmatpush.msra.mxu0 0.0
        %1665 = vmatpush.msra.mxu0 0.0
        %1666 = vmatpush.msra.mxu0 %v1650
        %1667 = vmatpush.msra.mxu0 %v1649
        %1668 = vmatpush.msra.mxu0 %v1648
        %1669 = vmatpush.msra.mxu0 %v1647
        %1670 = vmatpush.msra.mxu0 %v1646
        %1671 = vmatpush.msra.mxu0 %v1645
        %1672 = vmatpush.msra.mxu0 %v1644
        %1673 = vmatpush.msra.mxu0 %v1643
        %1674 = vmatmul.f32.gmra.mxu0 %v1656
        %v1675 = vpop.f32.mrf.mxu0
        %v1676 = vadd.f32 %v1653, %v1675
        %1677 = vdwg.mxu0
        %v1678 = vadd.f32 %v1676, %v1602
        %v1679 = vld [vmem:[%s26] sm:$0x1]
        %v1680 = vld [vmem:[%s27] sm:$0x1]
        %v1681 = vsel %vm932, %v1678, 0.0
        %1682 = vadd.xlane.f32.xlu0 %v1681
        %v1683 = vpop.xlane.xlu0 %1682
        %v1684 = vmul.f32 %v1683, %v942
        %v1685 = vsub.f32 %v1678, %v1684
        %v1686 = vmul.f32 %v1685, %v1685
        %v1687 = vsel %vm932, %v1686, 0.0
        %1688 = vadd.xlane.f32.xlu0 %v1687
        %v1689 = vpop.xlane.xlu0 %1688
        %v1690 = vmul.f32 %v1689, %v942
        %v1691 = vadd.f32 %v1690, 1e-12
        %v1692 = vrsqrt.pop %v1691
        %v1693 = vmul.f32 %v1692, %v1691
        %v1694 = vmul.f32 %v1693, %v1692
        %v1695 = vmul.f32 0.5, %v1694
        %v1696 = vsub.f32 1.5, %v1695
        %v1697 = vmul.f32 %v1692, %v1696
        %vm1698 = vweird.f32 %v1691
        %vm1699 = vweird.f32 %v1692
        %vm1700 = vmor %vm1698, %vm1699
        %v1701 = vsel %vm1700, %v1692, %v1697
        %v1702 = vmul.f32 %v1685, %v1701
        %v1704 = vperm.slane %v1679, 0
        %v1706 = vmul.f32 %v1702, %v1704
        %v1708 = vperm.slane %v1680, 0
        %v1710 = vadd.f32 %v1706, %v1708
        %1711 = vst.msk [vmem:[%s928] sm:$0xff] %vm932, %v1710
        %s1712 = sand.u32 %s655, 1
        %s1713 = scalar_lea.sflag [#allocation4], %s1712
        %s1714 = sand.u32 %s655, 1
        %s1715 = smul.addr %s1714, 8
        %s1716 = scalar_lea.vmem [#allocation10], %s1715
        // Predicated region
        $region149: #{tpu_custom_call.1} parent=131 // pred_check
          %p1717 = pneg %p665
        $region150: #{tpu_custom_call.1} parent=131 // pred_check_branch
          %1719 = sbr.rel (%p1717) target = $region152
        $region151: #{tpu_custom_call.1} parent=131 // pred_region
          %1721 = vsyncadd %s1713, 0
          %s1722 = smul.addr %s49, 8
          %s1723 = scalar_lea.hbm %s28, %s1722
          %s1725 = sshll.u32 %s1716, 4
          %s1726 = int_to_ptr.vmem [resolvable:$true] %s1725
          %s1727 = sshll.u32 %s1723, 4
          %s1728 = int_to_ptr.hbm [resolvable:$true] %s1727
          %1730 = dma.vmem_to_hbm [thread:$0]  %s1726, 128, %s1728, %s1713
        $region152: #{tpu_custom_call.1} parent=131 // pred_fallthru
          _
      $region132: #{tpu_custom_call.1} parent=5 // pred_fallthru
        _
      %p1731 = scmp.le.s32.totalorder 2, %s44
      // Predicated region
      $region153: #{tpu_custom_call.1} parent=5 // pred_check
        %p1732 = pneg %p1731
      $region154: #{tpu_custom_call.1} parent=5 // pred_check_branch
        %1734 = sbr.rel (%p1732) target = $region156
      $region155: #{tpu_custom_call.1} parent=5 // pred_region
        %s1735 = ssub.s32 %s44, 2
        // Predicated region
        $region157: #{tpu_custom_call.1} parent=155 // pred_check
          %p1736 = pneg %p671
        $region158: #{tpu_custom_call.1} parent=155 // pred_check_branch
          %1738 = sbr.rel (%p1736) target = $region160
        $region159: #{tpu_custom_call.1} parent=155 // pred_region
          %s1739 = sand.u32 %s656, 1
          %s1740 = scalar_lea.sflag [#allocation4], %s1739
          %s1741 = sand.u32 %s656, 1
          %s1742 = smul.addr %s1741, 8
          %s1743 = scalar_lea.vmem [#allocation10], %s1742
          %1745 = dma.done %s1740, 128
        $region160: #{tpu_custom_call.1} parent=155 // pred_fallthru
          _
      $region156: #{tpu_custom_call.1} parent=5 // pred_fallthru
        _
    $region6: #{tpu_custom_call.1} parent=1 // loop_footer
      %s48 = sadd.s32 1, %s44
    $region7: #{tpu_custom_call.1} parent=1 // loop_footer_branch
      %43 = sbr.rel target = $region3
    $region8: #{tpu_custom_call.1} parent=1 // loop_exit
      _
    %1746 = vsyncpa [#allocation3], 1
    %s1747 = scalar_lea.sflag [#allocation3], 1
    %1748 = vsyncpa %s1747, 1
    %1749 = vsyncpa [#allocation6], 1
    %s1750 = scalar_lea.sflag [#allocation6], 1
    %1751 = vsyncpa %s1750, 1
    %1752 = vsyncpa [#allocation9], 1
    %1753 = vsyncpa [#allocation4], 1
    %s1754 = scalar_lea.sflag [#allocation4], 1
    %1755 = vsyncpa %s1754, 1

</llo_original>
